<compile_context>
chip_gen: v7x
topology: tpu7x:2x2x1
jax: 0.10.0
libtpu: 0.0.40
codegen_flags: <defaults>
</compile_context>

<pallas_src>
import jax
import jax.numpy as jnp
from jax.experimental import pallas as pl
from jax.experimental.pallas import tpu as pltpu

NUM_CLASSES = 100
NUM_CLASSES_PADDED = 128   # lane-dense output width (100 -> 128, zero-padded)
EMB_DIM = 512
HIDDEN = 256
TM_MAX = 512               # batch-tile cap: fills the 256x256 MXU, tiny VMEM


def _round_up(x, m):
    return ((x + m - 1) // m) * m


def _choose_tm(batch):
    """Pick the batch tile.

    Big enough to fill the MXU / amortize per-step overhead for large B,
    adaptive so small batches don't pad up to 512, and split into >= 2 tiles
    when possible so v7x's two TensorCores both get work.
    """
    tm = min(TM_MAX, _round_up(batch, 16))
    if batch > 16 and pl.cdiv(batch, tm) < 2:
        tm = _round_up(pl.cdiv(batch, 2), 16)
    return tm


def facenet_classifier_kernel(x_ref, wemb_ref, w1_ref, b1_ref, w2_ref, b2_ref,
                              out_ref):
    """Fused per-batch-tile: image tile -> embedding -> L2-norm -> MLP head.

    x_ref:    [TM, C*H*W]                 f32  (cast to bf16 in-kernel)
    wemb_ref: [C*H*W, 512]                bf16 (stand-in backbone projection)
    w1_ref:   [512, 256]                  bf16
    b1_ref:   [1, 256]                    f32
    w2_ref:   [256, NUM_CLASSES_PADDED]   bf16 (zero-padded 100 -> 128)
    b2_ref:   [1, NUM_CLASSES_PADDED]     f32  (zero-padded 100 -> 128)
    out_ref:  [TM, NUM_CLASSES_PADDED]    f32
    """
    # --- backbone stand-in: bf16 matmul on the MXU, f32 accumulation.
    #     Input cast happens here on the VPU (hidden under MXU work).
    x_bf = x_ref[...].astype(jnp.bfloat16)
    emb = jnp.dot(x_bf, wemb_ref[...],
                  preferred_element_type=jnp.float32)          # [TM, 512] f32

    # --- L2 normalization scale (VPU reduce + EUP rsqrt). The actual scaling
    #     is deferred past the next GEMM: diag(s)·(emb@W1) == (diag(s)·emb)@W1.
    inv = jax.lax.rsqrt(jnp.sum(emb * emb, axis=-1, keepdims=True) + 1e-12)

    # --- classifier head: Linear(512,256) -> ReLU -> Dropout(eval: identity)
    #     -> Linear(256, 128-padded)
    h = jnp.dot(emb.astype(jnp.bfloat16), w1_ref[...],
                preferred_element_type=jnp.float32) * inv + b1_ref[...]
    h = jnp.maximum(h, 0.0)
    # Dropout(p=0.5): identity at inference time.
    logits = jnp.dot(h.astype(jnp.bfloat16), w2_ref[...],
                     preferred_element_type=jnp.float32) + b2_ref[...]

    out_ref[...] = logits.astype(out_ref.dtype)


def _resident_spec(shape):
    """Weight/bias spec: constant index_map (VMEM-resident, fetched once);
    a single buffer is enough since it is never re-fetched."""
    return pl.BlockSpec(shape, lambda i: (0,) * len(shape),
                        pipeline_mode=pl.Buffered(1))


def facenet_classifier_forward(images, params):
    """images: [B, 3, 16, 16] NCHW float32. Returns [B, NUM_CLASSES] f32."""
    B = images.shape[0]
    in_features = images.shape[1] * images.shape[2] * images.shape[3]
    x_flat = images.reshape(B, in_features).astype(jnp.float32)

    TM = _choose_tm(B)
    n_tiles = pl.cdiv(B, TM)
    B_pad = n_tiles * TM
    if B_pad != B:
        x_flat = jnp.pad(x_flat, ((0, B_pad - B), (0, 0)))

    wemb, w1, b1, w2, b2 = params

    flops = 2 * B_pad * (in_features * EMB_DIM
                         + EMB_DIM * HIDDEN
                         + HIDDEN * NUM_CLASSES_PADDED)
    bytes_accessed = (x_flat.size * 4
                      + wemb.size * 2 + w1.size * 2 + w2.size * 2
                      + b1.size * 4 + b2.size * 4
                      + B_pad * NUM_CLASSES_PADDED * 4)

    out_padded = pl.pallas_call(
        facenet_classifier_kernel,
        out_shape=jax.ShapeDtypeStruct((B_pad, NUM_CLASSES_PADDED), jnp.float32),
        grid_spec=pltpu.PrefetchScalarGridSpec(
            num_scalar_prefetch=0,
            grid=(n_tiles,),
            in_specs=[
                # batch-tiled f32 input (cast to bf16 inside the kernel)
                pl.BlockSpec((TM, in_features), lambda i: (i, 0)),
                # weights / biases: constant index_map -> VMEM-resident
                _resident_spec((in_features, EMB_DIM)),
                _resident_spec((EMB_DIM, HIDDEN)),
                _resident_spec((1, HIDDEN)),
                _resident_spec((HIDDEN, NUM_CLASSES_PADDED)),
                _resident_spec((1, NUM_CLASSES_PADDED)),
            ],
            out_specs=pl.BlockSpec((TM, NUM_CLASSES_PADDED), lambda i: (i, 0)),
        ),
        compiler_params=pltpu.CompilerParams(
            dimension_semantics=("parallel",)),
        cost_estimate=pl.CostEstimate(
            flops=flops, transcendentals=B_pad, bytes_accessed=bytes_accessed),
    )(x_flat, wemb, w1, b1, w2, b2)

    # Strip batch padding and the 28 zero-padded class columns.
    return out_padded[:B, :NUM_CLASSES]


def init_params(key, in_features):
    k0, k1, k2, k3, k4 = jax.random.split(key, 5)
    # deterministic synthetic weights (no checkpoint loading)
    wemb = (jax.random.normal(k0, (in_features, EMB_DIM), jnp.float32)
            * 0.02).astype(jnp.bfloat16)
    w1 = (jax.random.normal(k1, (EMB_DIM, HIDDEN), jnp.float32)
          * (1.0 / EMB_DIM ** 0.5)).astype(jnp.bfloat16)
    b1 = jax.random.normal(k2, (1, HIDDEN), jnp.float32) * 0.01
    w2_core = (jax.random.normal(k3, (HIDDEN, NUM_CLASSES), jnp.float32)
               * (1.0 / HIDDEN ** 0.5)).astype(jnp.bfloat16)
    b2_core = jax.random.normal(k4, (1, NUM_CLASSES), jnp.float32) * 0.01
    # zero-pad the final layer to 128 output lanes (lane-dense stores)
    w2 = jnp.pad(w2_core, ((0, 0), (0, NUM_CLASSES_PADDED - NUM_CLASSES)))
    b2 = jnp.pad(b2_core, ((0, 0), (0, NUM_CLASSES_PADDED - NUM_CLASSES)))
    return wemb, w1, b1, w2, b2


def reference_forward(images, params):
    """Pure-JAX reference (PyTorch op order: normalize, then classifier)."""
    wemb, w1, b1, w2, b2 = params
    x = images.reshape(images.shape[0], -1).astype(jnp.bfloat16)
    emb = jnp.dot(x, wemb, preferred_element_type=jnp.float32)
    emb = emb / jnp.sqrt(jnp.sum(emb * emb, axis=-1, keepdims=True) + 1e-12)
    h = jnp.dot(emb.astype(jnp.bfloat16), w1,
                preferred_element_type=jnp.float32) + b1
    h = jnp.maximum(h, 0.0)
    logits = jnp.dot(h.astype(jnp.bfloat16), w2,
                     preferred_element_type=jnp.float32) + b2
    return logits[:, :NUM_CLASSES]


if __name__ == "__main__":
    key = jax.random.PRNGKey(0)
    k_img, k_param = jax.random.split(key)

    B, C, H, W = 2, 3, 16, 16  # small NCHW images
    images = jax.random.normal(k_img, (B, C, H, W), jnp.float32)
    params = init_params(k_param, C * H * W)

    out = facenet_classifier_forward(images, params)
    out = jax.block_until_ready(out)

    ref = reference_forward(images, params)
    assert out.shape == (B, NUM_CLASSES)
    # bf16 operands (and deferred L2 scaling) -> relaxed tolerance vs. the
    # f32-math reference.
    assert jnp.allclose(out, ref, atol=2e-2, rtol=2e-2)

    print("KERNEL_OK")
</pallas_src>

<mosaic_0001>
module attributes {stable_mosaic.version = 11 : i64} {
  func.func @facenet_classifier_kernel(%arg0: i32, %arg1: memref<16x768xf32, #tpu.memory_space<vmem>>, %arg2: memref<768x512xbf16, #tpu.memory_space<vmem>>, %arg3: memref<512x256xbf16, #tpu.memory_space<vmem>>, %arg4: memref<1x256xf32, #tpu.memory_space<vmem>>, %arg5: memref<256x128xbf16, #tpu.memory_space<vmem>>, %arg6: memref<1x128xf32, #tpu.memory_space<vmem>>, %arg7: memref<16x128xf32, #tpu.memory_space<vmem>>) attributes {dimension_semantics = [#tpu.dimension_semantics<parallel>], iteration_bounds = array<i64: 1>, scalar_prefetch = 0 : i64, scratch_operands = 0 : i64, tpu.core_type = #tpu.core_type<tc>, window_params = [{transform_indices = @transform_0, window_bounds = array<i64: 16, 768>}, {pipeline_mode = #tpu.pipeline_mode<synchronous>, transform_indices = @transform_1, window_bounds = array<i64: 768, 512>}, {pipeline_mode = #tpu.pipeline_mode<synchronous>, transform_indices = @transform_2, window_bounds = array<i64: 512, 256>}, {pipeline_mode = #tpu.pipeline_mode<synchronous>, transform_indices = @transform_3, window_bounds = array<i64: 1, 256>}, {pipeline_mode = #tpu.pipeline_mode<synchronous>, transform_indices = @transform_4, window_bounds = array<i64: 256, 128>}, {pipeline_mode = #tpu.pipeline_mode<synchronous>, transform_indices = @transform_5, window_bounds = array<i64: 1, 128>}, {transform_indices = @transform_6, window_bounds = array<i64: 16, 128>}]} {
    %c0 = arith.constant 0 : index
    %c0_0 = arith.constant 0 : index
    %0 = vector.load %arg1[%c0, %c0_0] : memref<16x768xf32, #tpu.memory_space<vmem>>, vector<16x768xf32>
    %1 = arith.truncf %0 : vector<16x768xf32> to vector<16x768xbf16>
    %c0_1 = arith.constant 0 : index
    %c0_2 = arith.constant 0 : index
    %2 = vector.load %arg2[%c0_1, %c0_2] : memref<768x512xbf16, #tpu.memory_space<vmem>>, vector<768x512xbf16>
    %cst = arith.constant dense<0.000000e+00> : vector<16x512xf32>
    %3 = tpu.matmul %1, %2, %cst {dimension_numbers = #tpu.dot_dimension_numbers<[1], [0], [0], [1], [0, 0, 1, 1], [], []>} : vector<16x768xbf16>, vector<768x512xbf16>, vector<16x512xf32> -> vector<16x512xf32>
    %4 = arith.mulf %3, %3 : vector<16x512xf32>
    %cst_3 = arith.constant dense<0.000000e+00> : vector<16xf32>
    %5 = vector.multi_reduction <add>, %4, %cst_3 [1] : vector<16x512xf32> to vector<16xf32>
    %6 = vector.shape_cast %5 : vector<16xf32> to vector<16x1xf32>
    %cst_4 = arith.constant 9.99999996E-13 : f32
    %7 = vector.broadcast %cst_4 : f32 to vector<16x1xf32>
    %8 = arith.addf %6, %7 : vector<16x1xf32>
    %9 = math.rsqrt %8 : vector<16x1xf32>
    %10 = arith.truncf %3 : vector<16x512xf32> to vector<16x512xbf16>
    %c0_5 = arith.constant 0 : index
    %c0_6 = arith.constant 0 : index
    %11 = vector.load %arg3[%c0_5, %c0_6] : memref<512x256xbf16, #tpu.memory_space<vmem>>, vector<512x256xbf16>
    %cst_7 = arith.constant dense<0.000000e+00> : vector<16x256xf32>
    %12 = tpu.matmul %10, %11, %cst_7 {dimension_numbers = #tpu.dot_dimension_numbers<[1], [0], [0], [1], [0, 0, 1, 1], [], []>} : vector<16x512xbf16>, vector<512x256xbf16>, vector<16x256xf32> -> vector<16x256xf32>
    %13 = vector.broadcast %9 : vector<16x1xf32> to vector<16x256xf32>
    %14 = arith.mulf %12, %13 : vector<16x256xf32>
    %c0_8 = arith.constant 0 : index
    %c0_9 = arith.constant 0 : index
    %15 = vector.load %arg4[%c0_8, %c0_9] : memref<1x256xf32, #tpu.memory_space<vmem>>, vector<1x256xf32>
    %16 = vector.broadcast %15 : vector<1x256xf32> to vector<16x256xf32>
    %17 = arith.addf %14, %16 : vector<16x256xf32>
    %cst_10 = arith.constant 0.000000e+00 : f32
    %18 = vector.broadcast %cst_10 : f32 to vector<16x256xf32>
    %19 = arith.maximumf %17, %18 : vector<16x256xf32>
    %20 = arith.truncf %19 : vector<16x256xf32> to vector<16x256xbf16>
    %c0_11 = arith.constant 0 : index
    %c0_12 = arith.constant 0 : index
    %21 = vector.load %arg5[%c0_11, %c0_12] : memref<256x128xbf16, #tpu.memory_space<vmem>>, vector<256x128xbf16>
    %cst_13 = arith.constant dense<0.000000e+00> : vector<16x128xf32>
    %22 = tpu.matmul %20, %21, %cst_13 {dimension_numbers = #tpu.dot_dimension_numbers<[1], [0], [0], [1], [0, 0, 1, 1], [], []>} : vector<16x256xbf16>, vector<256x128xbf16>, vector<16x128xf32> -> vector<16x128xf32>
    %c0_14 = arith.constant 0 : index
    %c0_15 = arith.constant 0 : index
    %23 = vector.load %arg6[%c0_14, %c0_15] : memref<1x128xf32, #tpu.memory_space<vmem>>, vector<1x128xf32>
    %24 = vector.broadcast %23 : vector<1x128xf32> to vector<16x128xf32>
    %25 = arith.addf %22, %24 : vector<16x128xf32>
    %c0_16 = arith.constant 0 : index
    %c0_17 = arith.constant 0 : index
    %26 = vector.load %arg7[%c0_16, %c0_17] : memref<16x128xf32, #tpu.memory_space<vmem>>, vector<16x128xf32>
    tpu.vector_store %arg7[%c0_16, %c0_17], %25 {strides = array<i32>} : memref<16x128xf32, #tpu.memory_space<vmem>>, vector<16x128xf32>,
    return
  }
  func.func @transform_0(%arg0: i32) -> (i32, i32) {
    %c0_i32 = arith.constant 0 : i32
    %c0_i32_0 = arith.constant 0 : i32
    return %arg0, %c0_i32 : i32, i32
  }
  func.func @transform_1(%arg0: i32) -> (i32, i32) {
    %c0_i32 = arith.constant 0 : i32
    %c0_i32_0 = arith.constant 0 : i32
    %c0_i32_1 = arith.constant 0 : i32
    return %c0_i32, %c0_i32_0 : i32, i32
  }
  func.func @transform_2(%arg0: i32) -> (i32, i32) {
    %c0_i32 = arith.constant 0 : i32
    %c0_i32_0 = arith.constant 0 : i32
    %c0_i32_1 = arith.constant 0 : i32
    return %c0_i32, %c0_i32_0 : i32, i32
  }
  func.func @transform_3(%arg0: i32) -> (i32, i32) {
    %c0_i32 = arith.constant 0 : i32
    %c0_i32_0 = arith.constant 0 : i32
    %c0_i32_1 = arith.constant 0 : i32
    return %c0_i32, %c0_i32_0 : i32, i32
  }
  func.func @transform_4(%arg0: i32) -> (i32, i32) {
    %c0_i32 = arith.constant 0 : i32
    %c0_i32_0 = arith.constant 0 : i32
    %c0_i32_1 = arith.constant 0 : i32
    return %c0_i32, %c0_i32_0 : i32, i32
  }
  func.func @transform_5(%arg0: i32) -> (i32, i32) {
    %c0_i32 = arith.constant 0 : i32
    %c0_i32_0 = arith.constant 0 : i32
    %c0_i32_1 = arith.constant 0 : i32
    return %c0_i32, %c0_i32_0 : i32, i32
  }
  func.func @transform_6(%arg0: i32) -> (i32, i32) {
    %c0_i32 = arith.constant 0 : i32
    %c0_i32_0 = arith.constant 0 : i32
    return %arg0, %c0_i32 : i32, i32
  }
}

</mosaic_0001>

<llo_original>
// kernel: tpu_custom_call.1
$region0: #{tpu_custom_call.1}
  #allocation0 [shape = 'u32[]', space=smem, size = 0x4, offset = 0x4, fixed_abs, tag = 'smem constant byte address 0x4 - core index']
  #allocation1 [shape = 'u32[144,128]{1,0:T(1,128)}', space=vmem, size = 0x12000, scoped, tag = 'internal scratch']
  %s0 = inlined_call_operand.hbm [shape: f32[16,768], index: 0, kind: input, shape index: {}]
  %s1 = inlined_call_operand.hbm [shape: bf16[768,512], index: 1, kind: input, shape index: {}]
  %s2 = inlined_call_operand.hbm [shape: bf16[512,256], index: 2, kind: input, shape index: {}]
  %s3 = inlined_call_operand.vmem [shape: f32[1,256], index: 3, kind: input, shape index: {}]
  %s4 = inlined_call_operand.hbm [shape: bf16[256,128], index: 4, kind: input, shape index: {}]
  %s5 = inlined_call_operand.vmem [shape: f32[1,128], index: 5, kind: input, shape index: {}]
  %s6 = inlined_call_operand.hbm [shape: f32[16,128], index: 6, kind: output, shape index: {}]
  %s7 = sld [smem:[#allocation0]]
  $region50: #{tpu_custom_call.1} parent=0
    _
  %s9 = ssub.s32 1, %s7
  %s10 = scalar_select 0, %s9, %s7
  $region1: #{tpu_custom_call.1} parent=0
    #allocation2 [shape = 'u8[49152]{0}', space=vmem, size = 0xc000, scoped, tag = 'input window, operand 0, single buffered']
    #allocation3 [shape = 's32[1]{0}', space=sflag, size = 0x4, scoped, tag = 'scoped memory for tpu_custom_call.1']
    #allocation4 [shape = 's32[1]{0}', space=sflag, size = 0x4, scoped, tag = 'scoped memory for tpu_custom_call.1']
    #allocation5 [shape = 'u8[786432]{0}', space=vmem, size = 0xc0000, scoped, tag = 'input window, operand 1, single buffered']
    #allocation6 [shape = 's32[1]{0}', space=sflag, size = 0x4, scoped, tag = 'scoped memory for tpu_custom_call.1']
    #allocation7 [shape = 'u8[262144]{0}', space=vmem, size = 0x40000, scoped, tag = 'input window, operand 2, single buffered']
    #allocation8 [shape = 'u8[65536]{0}', space=vmem, size = 0x10000, scoped, tag = 'input window, operand 4, single buffered']
    #allocation9 [shape = 's32[1]{0}', space=sflag, size = 0x4, scoped, tag = 'scoped memory for tpu_custom_call.1']
    #allocation10 [shape = 'u8[8192]{0}', space=vmem, size = 0x2000, scoped, tag = 'output window, operand 0, single buffered']
    %11 = vsyncpa [#allocation3], 0
    %12 = vsyncpa [#allocation6], 0
    %13 = vsyncpa [#allocation9], 0
    %14 = vsyncpa [#allocation4], 0
    // Predicated region
    $region2: #{tpu_custom_call.1} parent=1 // pred_check
      _
    $region3: #{tpu_custom_call.1} parent=1 // pred_check_branch
      %16 = sbr.rel (0) target = $region5
    $region4: #{tpu_custom_call.1} parent=1 // pred_region
      %s18 = ssub.s32 1536, 1536
      %19 = vsyncadd [#allocation3], %s18
      %s20 = sshll.u32 [#allocation2], 4
      %s21 = int_to_ptr.vmem [resolvable:$true] %s20
      %26 = dma.hbm_to_vmem [thread:$0]  %s0, 1536, %s21, [#allocation3], 768, 768, 48
    $region5: #{tpu_custom_call.1} parent=1 // pred_fallthru
      _
    // Predicated region
    $region6: #{tpu_custom_call.1} parent=1 // pred_check
      _
    $region7: #{tpu_custom_call.1} parent=1 // pred_check_branch
      %28 = sbr.rel (0) target = $region9
    $region8: #{tpu_custom_call.1} parent=1 // pred_region
      %s30 = ssub.s32 24576, 24576
      %31 = vsyncadd [#allocation6], %s30
      %s32 = sshll.u32 [#allocation5], 4
      %s33 = int_to_ptr.vmem [resolvable:$true] %s32
      %38 = dma.hbm_to_vmem [thread:$0]  %s1, 24576, %s33, [#allocation6], 256, 256, 16
    $region9: #{tpu_custom_call.1} parent=1 // pred_fallthru
      _
    // Predicated region
    $region10: #{tpu_custom_call.1} parent=1 // pred_check
      _
    $region11: #{tpu_custom_call.1} parent=1 // pred_check_branch
      %40 = sbr.rel (0) target = $region13
    $region12: #{tpu_custom_call.1} parent=1 // pred_region
      %s42 = ssub.s32 8192, 8192
      %43 = vsyncadd [#allocation6], %s42
      %s44 = sshll.u32 [#allocation7], 4
      %s45 = int_to_ptr.vmem [resolvable:$true] %s44
      %50 = dma.hbm_to_vmem [thread:$0]  %s2, 8192, %s45, [#allocation6], 128, 128, 8
    $region13: #{tpu_custom_call.1} parent=1 // pred_fallthru
      _
    // Predicated region
    $region14: #{tpu_custom_call.1} parent=1 // pred_check
      _
    $region15: #{tpu_custom_call.1} parent=1 // pred_check_branch
      %52 = sbr.rel (0) target = $region17
    $region16: #{tpu_custom_call.1} parent=1 // pred_region
      _
    $region17: #{tpu_custom_call.1} parent=1 // pred_fallthru
      _
    // Predicated region
    $region18: #{tpu_custom_call.1} parent=1 // pred_check
      _
    $region19: #{tpu_custom_call.1} parent=1 // pred_check_branch
      %54 = sbr.rel (0) target = $region21
    $region20: #{tpu_custom_call.1} parent=1 // pred_region
      %s56 = ssub.s32 2048, 2048
      %57 = vsyncadd [#allocation9], %s56
      %s58 = sshll.u32 [#allocation8], 4
      %s59 = int_to_ptr.vmem [resolvable:$true] %s58
      %64 = dma.hbm_to_vmem [thread:$0]  %s4, 2048, %s59, [#allocation9], 64, 64, 4
    $region21: #{tpu_custom_call.1} parent=1 // pred_fallthru
      _
    // Predicated region
    $region22: #{tpu_custom_call.1} parent=1 // pred_check
      _
    $region23: #{tpu_custom_call.1} parent=1 // pred_check_branch
      %66 = sbr.rel (0) target = $region25
    $region24: #{tpu_custom_call.1} parent=1 // pred_region
      _
    $region25: #{tpu_custom_call.1} parent=1 // pred_fallthru
      _
    // Predicated region
    $region26: #{tpu_custom_call.1} parent=1 // pred_check
      _
    $region27: #{tpu_custom_call.1} parent=1 // pred_check_branch
      %68 = sbr.rel (0) target = $region29
    $region28: #{tpu_custom_call.1} parent=1 // pred_region
      %69 = dma.done [#allocation3], 1536
    $region29: #{tpu_custom_call.1} parent=1 // pred_fallthru
      _
    // Predicated region
    $region30: #{tpu_custom_call.1} parent=1 // pred_check
      _
    $region31: #{tpu_custom_call.1} parent=1 // pred_check_branch
      %71 = sbr.rel (0) target = $region33
    $region32: #{tpu_custom_call.1} parent=1 // pred_region
      %72 = dma.done [#allocation6], 24576
    $region33: #{tpu_custom_call.1} parent=1 // pred_fallthru
      _
    // Predicated region
    $region34: #{tpu_custom_call.1} parent=1 // pred_check
      _
    $region35: #{tpu_custom_call.1} parent=1 // pred_check_branch
      %74 = sbr.rel (0) target = $region37
    $region36: #{tpu_custom_call.1} parent=1 // pred_region
      %75 = dma.done [#allocation6], 8192
    $region37: #{tpu_custom_call.1} parent=1 // pred_fallthru
      _
    // Predicated region
    $region38: #{tpu_custom_call.1} parent=1 // pred_check
      _
    $region39: #{tpu_custom_call.1} parent=1 // pred_check_branch
      %77 = sbr.rel (0) target = $region41
    $region40: #{tpu_custom_call.1} parent=1 // pred_region
      %78 = dma.done [#allocation9], 2048
    $region41: #{tpu_custom_call.1} parent=1 // pred_fallthru
      _
    %v80 = vld [vmem:[#allocation2] sm:$0xff]
    %v81 = vld [vmem:[#allocation2 + $0x8] sm:$0xff]
    %v82 = vld [vmem:[#allocation2 + $0x10] sm:$0xff]
    %v83 = vld [vmem:[#allocation2 + $0x18] sm:$0xff]
    %v84 = vld [vmem:[#allocation2 + $0x20] sm:$0xff]
    %v85 = vld [vmem:[#allocation2 + $0x28] sm:$0xff]
    %v86 = vld [vmem:[#allocation2 + $0x30] sm:$0xff]
    %v87 = vld [vmem:[#allocation2 + $0x38] sm:$0xff]
    %v88 = vld [vmem:[#allocation2 + $0x40] sm:$0xff]
    %v89 = vld [vmem:[#allocation2 + $0x48] sm:$0xff]
    %v90 = vld [vmem:[#allocation2 + $0x50] sm:$0xff]
    %v91 = vld [vmem:[#allocation2 + $0x58] sm:$0xff]
    %v92 = vpack.c.bf16 %v86, %v80
    %v93 = vpack.c.bf16 %v87, %v81
    %v94 = vpack.c.bf16 %v88, %v82
    %v95 = vpack.c.bf16 %v89, %v83
    %v96 = vpack.c.bf16 %v90, %v84
    %v97 = vpack.c.bf16 %v91, %v85
    %v98 = vld [vmem:[#allocation5] sm:$0xff]
    %v99 = vld [vmem:[#allocation5 + $0x8] sm:$0xff]
    %v100 = vld [vmem:[#allocation5 + $0x10] sm:$0xff]
    %v101 = vld [vmem:[#allocation5 + $0x18] sm:$0xff]
    %v102 = vld [vmem:[#allocation5 + $0x20] sm:$0xff]
    %v103 = vld [vmem:[#allocation5 + $0x28] sm:$0xff]
    %v104 = vld [vmem:[#allocation5 + $0x30] sm:$0xff]
    %v105 = vld [vmem:[#allocation5 + $0x38] sm:$0xff]
    %v106 = vld [vmem:[#allocation5 + $0x40] sm:$0xff]
    %v107 = vld [vmem:[#allocation5 + $0x48] sm:$0xff]
    %v108 = vld [vmem:[#allocation5 + $0x50] sm:$0xff]
    %v109 = vld [vmem:[#allocation5 + $0x58] sm:$0xff]
    %v110 = vld [vmem:[#allocation5 + $0x60] sm:$0xff]
    %v111 = vld [vmem:[#allocation5 + $0x68] sm:$0xff]
    %v112 = vld [vmem:[#allocation5 + $0x70] sm:$0xff]
    %v113 = vld [vmem:[#allocation5 + $0x78] sm:$0xff]
    %v114 = vld [vmem:[#allocation5 + $0x80] sm:$0xff]
    %v115 = vld [vmem:[#allocation5 + $0x88] sm:$0xff]
    %v116 = vld [vmem:[#allocation5 + $0x90] sm:$0xff]
    %v117 = vld [vmem:[#allocation5 + $0x98] sm:$0xff]
    %v118 = vld [vmem:[#allocation5 + $0xa0] sm:$0xff]
    %v119 = vld [vmem:[#allocation5 + $0xa8] sm:$0xff]
    %v120 = vld [vmem:[#allocation5 + $0xb0] sm:$0xff]
    %v121 = vld [vmem:[#allocation5 + $0xb8] sm:$0xff]
    %v122 = vld [vmem:[#allocation5 + $0xc0] sm:$0xff]
    %v123 = vld [vmem:[#allocation5 + $0xc8] sm:$0xff]
    %v124 = vld [vmem:[#allocation5 + $0xd0] sm:$0xff]
    %v125 = vld [vmem:[#allocation5 + $0xd8] sm:$0xff]
    %v126 = vld [vmem:[#allocation5 + $0xe0] sm:$0xff]
    %v127 = vld [vmem:[#allocation5 + $0xe8] sm:$0xff]
    %v128 = vld [vmem:[#allocation5 + $0xf0] sm:$0xff]
    %v129 = vld [vmem:[#allocation5 + $0xf8] sm:$0xff]
    %v130 = vld [vmem:[#allocation5 + $0x100] sm:$0xff]
    %v131 = vld [vmem:[#allocation5 + $0x108] sm:$0xff]
    %v132 = vld [vmem:[#allocation5 + $0x110] sm:$0xff]
    %v133 = vld [vmem:[#allocation5 + $0x118] sm:$0xff]
    %v134 = vld [vmem:[#allocation5 + $0x120] sm:$0xff]
    %v135 = vld [vmem:[#allocation5 + $0x128] sm:$0xff]
    %v136 = vld [vmem:[#allocation5 + $0x130] sm:$0xff]
    %v137 = vld [vmem:[#allocation5 + $0x138] sm:$0xff]
    %v138 = vld [vmem:[#allocation5 + $0x140] sm:$0xff]
    %v139 = vld [vmem:[#allocation5 + $0x148] sm:$0xff]
    %v140 = vld [vmem:[#allocation5 + $0x150] sm:$0xff]
    %v141 = vld [vmem:[#allocation5 + $0x158] sm:$0xff]
    %v142 = vld [vmem:[#allocation5 + $0x160] sm:$0xff]
    %v143 = vld [vmem:[#allocation5 + $0x168] sm:$0xff]
    %v144 = vld [vmem:[#allocation5 + $0x170] sm:$0xff]
    %v145 = vld [vmem:[#allocation5 + $0x178] sm:$0xff]
    %v146 = vld [vmem:[#allocation5 + $0x180] sm:$0xff]
    %v147 = vld [vmem:[#allocation5 + $0x188] sm:$0xff]
    %v148 = vld [vmem:[#allocation5 + $0x190] sm:$0xff]
    %v149 = vld [vmem:[#allocation5 + $0x198] sm:$0xff]
    %v150 = vld [vmem:[#allocation5 + $0x1a0] sm:$0xff]
    %v151 = vld [vmem:[#allocation5 + $0x1a8] sm:$0xff]
    %v152 = vld [vmem:[#allocation5 + $0x1b0] sm:$0xff]
    %v153 = vld [vmem:[#allocation5 + $0x1b8] sm:$0xff]
    %v154 = vld [vmem:[#allocation5 + $0x1c0] sm:$0xff]
    %v155 = vld [vmem:[#allocation5 + $0x1c8] sm:$0xff]
    %v156 = vld [vmem:[#allocation5 + $0x1d0] sm:$0xff]
    %v157 = vld [vmem:[#allocation5 + $0x1d8] sm:$0xff]
    %v158 = vld [vmem:[#allocation5 + $0x1e0] sm:$0xff]
    %v159 = vld [vmem:[#allocation5 + $0x1e8] sm:$0xff]
    %v160 = vld [vmem:[#allocation5 + $0x1f0] sm:$0xff]
    %v161 = vld [vmem:[#allocation5 + $0x1f8] sm:$0xff]
    %v162 = vld [vmem:[#allocation5 + $0x200] sm:$0xff]
    %v163 = vld [vmem:[#allocation5 + $0x208] sm:$0xff]
    %v164 = vld [vmem:[#allocation5 + $0x210] sm:$0xff]
    %v165 = vld [vmem:[#allocation5 + $0x218] sm:$0xff]
    %v166 = vld [vmem:[#allocation5 + $0x220] sm:$0xff]
    %v167 = vld [vmem:[#allocation5 + $0x228] sm:$0xff]
    %v168 = vld [vmem:[#allocation5 + $0x230] sm:$0xff]
    %v169 = vld [vmem:[#allocation5 + $0x238] sm:$0xff]
    %v170 = vld [vmem:[#allocation5 + $0x240] sm:$0xff]
    %v171 = vld [vmem:[#allocation5 + $0x248] sm:$0xff]
    %v172 = vld [vmem:[#allocation5 + $0x250] sm:$0xff]
    %v173 = vld [vmem:[#allocation5 + $0x258] sm:$0xff]
    %v174 = vld [vmem:[#allocation5 + $0x260] sm:$0xff]
    %v175 = vld [vmem:[#allocation5 + $0x268] sm:$0xff]
    %v176 = vld [vmem:[#allocation5 + $0x270] sm:$0xff]
    %v177 = vld [vmem:[#allocation5 + $0x278] sm:$0xff]
    %v178 = vld [vmem:[#allocation5 + $0x280] sm:$0xff]
    %v179 = vld [vmem:[#allocation5 + $0x288] sm:$0xff]
    %v180 = vld [vmem:[#allocation5 + $0x290] sm:$0xff]
    %v181 = vld [vmem:[#allocation5 + $0x298] sm:$0xff]
    %v182 = vld [vmem:[#allocation5 + $0x2a0] sm:$0xff]
    %v183 = vld [vmem:[#allocation5 + $0x2a8] sm:$0xff]
    %v184 = vld [vmem:[#allocation5 + $0x2b0] sm:$0xff]
    %v185 = vld [vmem:[#allocation5 + $0x2b8] sm:$0xff]
    %v186 = vld [vmem:[#allocation5 + $0x2c0] sm:$0xff]
    %v187 = vld [vmem:[#allocation5 + $0x2c8] sm:$0xff]
    %v188 = vld [vmem:[#allocation5 + $0x2d0] sm:$0xff]
    %v189 = vld [vmem:[#allocation5 + $0x2d8] sm:$0xff]
    %v190 = vld [vmem:[#allocation5 + $0x2e0] sm:$0xff]
    %v191 = vld [vmem:[#allocation5 + $0x2e8] sm:$0xff]
    %v192 = vld [vmem:[#allocation5 + $0x2f0] sm:$0xff]
    %v193 = vld [vmem:[#allocation5 + $0x2f8] sm:$0xff]
    %v194 = vld [vmem:[#allocation5 + $0x300] sm:$0xff]
    %v195 = vld [vmem:[#allocation5 + $0x308] sm:$0xff]
    %v196 = vld [vmem:[#allocation5 + $0x310] sm:$0xff]
    %v197 = vld [vmem:[#allocation5 + $0x318] sm:$0xff]
    %v198 = vld [vmem:[#allocation5 + $0x320] sm:$0xff]
    %v199 = vld [vmem:[#allocation5 + $0x328] sm:$0xff]
    %v200 = vld [vmem:[#allocation5 + $0x330] sm:$0xff]
    %v201 = vld [vmem:[#allocation5 + $0x338] sm:$0xff]
    %v202 = vld [vmem:[#allocation5 + $0x340] sm:$0xff]
    %v203 = vld [vmem:[#allocation5 + $0x348] sm:$0xff]
    %v204 = vld [vmem:[#allocation5 + $0x350] sm:$0xff]
    %v205 = vld [vmem:[#allocation5 + $0x358] sm:$0xff]
    %v206 = vld [vmem:[#allocation5 + $0x360] sm:$0xff]
    %v207 = vld [vmem:[#allocation5 + $0x368] sm:$0xff]
    %v208 = vld [vmem:[#allocation5 + $0x370] sm:$0xff]
    %v209 = vld [vmem:[#allocation5 + $0x378] sm:$0xff]
    %v210 = vld [vmem:[#allocation5 + $0x380] sm:$0xff]
    %v211 = vld [vmem:[#allocation5 + $0x388] sm:$0xff]
    %v212 = vld [vmem:[#allocation5 + $0x390] sm:$0xff]
    %v213 = vld [vmem:[#allocation5 + $0x398] sm:$0xff]
    %v214 = vld [vmem:[#allocation5 + $0x3a0] sm:$0xff]
    %v215 = vld [vmem:[#allocation5 + $0x3a8] sm:$0xff]
    %v216 = vld [vmem:[#allocation5 + $0x3b0] sm:$0xff]
    %v217 = vld [vmem:[#allocation5 + $0x3b8] sm:$0xff]
    %v218 = vld [vmem:[#allocation5 + $0x3c0] sm:$0xff]
    %v219 = vld [vmem:[#allocation5 + $0x3c8] sm:$0xff]
    %v220 = vld [vmem:[#allocation5 + $0x3d0] sm:$0xff]
    %v221 = vld [vmem:[#allocation5 + $0x3d8] sm:$0xff]
    %v222 = vld [vmem:[#allocation5 + $0x3e0] sm:$0xff]
    %v223 = vld [vmem:[#allocation5 + $0x3e8] sm:$0xff]
    %v224 = vld [vmem:[#allocation5 + $0x3f0] sm:$0xff]
    %v225 = vld [vmem:[#allocation5 + $0x3f8] sm:$0xff]
    %v226 = vld [vmem:[#allocation5 + $0x400] sm:$0xff]
    %v227 = vld [vmem:[#allocation5 + $0x408] sm:$0xff]
    %v228 = vld [vmem:[#allocation5 + $0x410] sm:$0xff]
    %v229 = vld [vmem:[#allocation5 + $0x418] sm:$0xff]
    %v230 = vld [vmem:[#allocation5 + $0x420] sm:$0xff]
    %v231 = vld [vmem:[#allocation5 + $0x428] sm:$0xff]
    %v232 = vld [vmem:[#allocation5 + $0x430] sm:$0xff]
    %v233 = vld [vmem:[#allocation5 + $0x438] sm:$0xff]
    %v234 = vld [vmem:[#allocation5 + $0x440] sm:$0xff]
    %v235 = vld [vmem:[#allocation5 + $0x448] sm:$0xff]
    %v236 = vld [vmem:[#allocation5 + $0x450] sm:$0xff]
    %v237 = vld [vmem:[#allocation5 + $0x458] sm:$0xff]
    %v238 = vld [vmem:[#allocation5 + $0x460] sm:$0xff]
    %v239 = vld [vmem:[#allocation5 + $0x468] sm:$0xff]
    %v240 = vld [vmem:[#allocation5 + $0x470] sm:$0xff]
    %v241 = vld [vmem:[#allocation5 + $0x478] sm:$0xff]
    %v242 = vld [vmem:[#allocation5 + $0x480] sm:$0xff]
    %v243 = vld [vmem:[#allocation5 + $0x488] sm:$0xff]
    %v244 = vld [vmem:[#allocation5 + $0x490] sm:$0xff]
    %v245 = vld [vmem:[#allocation5 + $0x498] sm:$0xff]
    %v246 = vld [vmem:[#allocation5 + $0x4a0] sm:$0xff]
    %v247 = vld [vmem:[#allocation5 + $0x4a8] sm:$0xff]
    %v248 = vld [vmem:[#allocation5 + $0x4b0] sm:$0xff]
    %v249 = vld [vmem:[#allocation5 + $0x4b8] sm:$0xff]
    %v250 = vld [vmem:[#allocation5 + $0x4c0] sm:$0xff]
    %v251 = vld [vmem:[#allocation5 + $0x4c8] sm:$0xff]
    %v252 = vld [vmem:[#allocation5 + $0x4d0] sm:$0xff]
    %v253 = vld [vmem:[#allocation5 + $0x4d8] sm:$0xff]
    %v254 = vld [vmem:[#allocation5 + $0x4e0] sm:$0xff]
    %v255 = vld [vmem:[#allocation5 + $0x4e8] sm:$0xff]
    %v256 = vld [vmem:[#allocation5 + $0x4f0] sm:$0xff]
    %v257 = vld [vmem:[#allocation5 + $0x4f8] sm:$0xff]
    %v258 = vld [vmem:[#allocation5 + $0x500] sm:$0xff]
    %v259 = vld [vmem:[#allocation5 + $0x508] sm:$0xff]
    %v260 = vld [vmem:[#allocation5 + $0x510] sm:$0xff]
    %v261 = vld [vmem:[#allocation5 + $0x518] sm:$0xff]
    %v262 = vld [vmem:[#allocation5 + $0x520] sm:$0xff]
    %v263 = vld [vmem:[#allocation5 + $0x528] sm:$0xff]
    %v264 = vld [vmem:[#allocation5 + $0x530] sm:$0xff]
    %v265 = vld [vmem:[#allocation5 + $0x538] sm:$0xff]
    %v266 = vld [vmem:[#allocation5 + $0x540] sm:$0xff]
    %v267 = vld [vmem:[#allocation5 + $0x548] sm:$0xff]
    %v268 = vld [vmem:[#allocation5 + $0x550] sm:$0xff]
    %v269 = vld [vmem:[#allocation5 + $0x558] sm:$0xff]
    %v270 = vld [vmem:[#allocation5 + $0x560] sm:$0xff]
    %v271 = vld [vmem:[#allocation5 + $0x568] sm:$0xff]
    %v272 = vld [vmem:[#allocation5 + $0x570] sm:$0xff]
    %v273 = vld [vmem:[#allocation5 + $0x578] sm:$0xff]
    %v274 = vld [vmem:[#allocation5 + $0x580] sm:$0xff]
    %v275 = vld [vmem:[#allocation5 + $0x588] sm:$0xff]
    %v276 = vld [vmem:[#allocation5 + $0x590] sm:$0xff]
    %v277 = vld [vmem:[#allocation5 + $0x598] sm:$0xff]
    %v278 = vld [vmem:[#allocation5 + $0x5a0] sm:$0xff]
    %v279 = vld [vmem:[#allocation5 + $0x5a8] sm:$0xff]
    %v280 = vld [vmem:[#allocation5 + $0x5b0] sm:$0xff]
    %v281 = vld [vmem:[#allocation5 + $0x5b8] sm:$0xff]
    %v282 = vld [vmem:[#allocation5 + $0x5c0] sm:$0xff]
    %v283 = vld [vmem:[#allocation5 + $0x5c8] sm:$0xff]
    %v284 = vld [vmem:[#allocation5 + $0x5d0] sm:$0xff]
    %v285 = vld [vmem:[#allocation5 + $0x5d8] sm:$0xff]
    %v286 = vld [vmem:[#allocation5 + $0x5e0] sm:$0xff]
    %v287 = vld [vmem:[#allocation5 + $0x5e8] sm:$0xff]
    %v288 = vld [vmem:[#allocation5 + $0x5f0] sm:$0xff]
    %v289 = vld [vmem:[#allocation5 + $0x5f8] sm:$0xff]
    %v482 = vunpack.c.l.b16 %v98
    %v483 = vunpack.c.h.b16 %v98
    %v484 = vunpack.c.l.b16 %v99
    %v485 = vunpack.c.h.b16 %v99
    %v486 = vunpack.c.l.b16 %v100
    %v487 = vunpack.c.h.b16 %v100
    %v488 = vunpack.c.l.b16 %v101
    %v489 = vunpack.c.h.b16 %v101
    %v490 = vunpack.c.l.b16 %v102
    %v491 = vunpack.c.h.b16 %v102
    %v492 = vunpack.c.l.b16 %v103
    %v493 = vunpack.c.h.b16 %v103
    %v494 = vunpack.c.l.b16 %v104
    %v495 = vunpack.c.h.b16 %v104
    %v496 = vunpack.c.l.b16 %v105
    %v497 = vunpack.c.h.b16 %v105
    %v498 = vunpack.c.l.b16 %v106
    %v499 = vunpack.c.h.b16 %v106
    %v500 = vunpack.c.l.b16 %v107
    %v501 = vunpack.c.h.b16 %v107
    %v502 = vunpack.c.l.b16 %v108
    %v503 = vunpack.c.h.b16 %v108
    %v504 = vunpack.c.l.b16 %v109
    %v505 = vunpack.c.h.b16 %v109
    %v506 = vunpack.c.l.b16 %v110
    %v507 = vunpack.c.h.b16 %v110
    %v508 = vunpack.c.l.b16 %v111
    %v509 = vunpack.c.h.b16 %v111
    %v510 = vunpack.c.l.b16 %v112
    %v511 = vunpack.c.h.b16 %v112
    %v512 = vunpack.c.l.b16 %v113
    %v513 = vunpack.c.h.b16 %v113
    %v514 = vunpack.c.l.b16 %v114
    %v515 = vunpack.c.h.b16 %v114
    %v516 = vunpack.c.l.b16 %v115
    %v517 = vunpack.c.h.b16 %v115
    %v518 = vunpack.c.l.b16 %v116
    %v519 = vunpack.c.h.b16 %v116
    %v520 = vunpack.c.l.b16 %v117
    %v521 = vunpack.c.h.b16 %v117
    %v522 = vunpack.c.l.b16 %v118
    %v523 = vunpack.c.h.b16 %v118
    %v524 = vunpack.c.l.b16 %v119
    %v525 = vunpack.c.h.b16 %v119
    %v526 = vunpack.c.l.b16 %v120
    %v527 = vunpack.c.h.b16 %v120
    %v528 = vunpack.c.l.b16 %v121
    %v529 = vunpack.c.h.b16 %v121
    %v530 = vunpack.c.l.b16 %v122
    %v531 = vunpack.c.h.b16 %v122
    %v532 = vunpack.c.l.b16 %v123
    %v533 = vunpack.c.h.b16 %v123
    %v534 = vunpack.c.l.b16 %v124
    %v535 = vunpack.c.h.b16 %v124
    %v536 = vunpack.c.l.b16 %v125
    %v537 = vunpack.c.h.b16 %v125
    %v538 = vunpack.c.l.b16 %v126
    %v539 = vunpack.c.h.b16 %v126
    %v540 = vunpack.c.l.b16 %v127
    %v541 = vunpack.c.h.b16 %v127
    %v542 = vunpack.c.l.b16 %v128
    %v543 = vunpack.c.h.b16 %v128
    %v544 = vunpack.c.l.b16 %v129
    %v545 = vunpack.c.h.b16 %v129
    %v546 = vunpack.c.l.b16 %v130
    %v547 = vunpack.c.h.b16 %v130
    %v548 = vunpack.c.l.b16 %v131
    %v549 = vunpack.c.h.b16 %v131
    %v550 = vunpack.c.l.b16 %v132
    %v551 = vunpack.c.h.b16 %v132
    %v552 = vunpack.c.l.b16 %v133
    %v553 = vunpack.c.h.b16 %v133
    %v554 = vunpack.c.l.b16 %v134
    %v555 = vunpack.c.h.b16 %v134
    %v556 = vunpack.c.l.b16 %v135
    %v557 = vunpack.c.h.b16 %v135
    %v558 = vunpack.c.l.b16 %v136
    %v559 = vunpack.c.h.b16 %v136
    %v560 = vunpack.c.l.b16 %v137
    %v561 = vunpack.c.h.b16 %v137
    %v562 = vunpack.c.l.b16 %v138
    %v563 = vunpack.c.h.b16 %v138
    %v564 = vunpack.c.l.b16 %v139
    %v565 = vunpack.c.h.b16 %v139
    %v566 = vunpack.c.l.b16 %v140
    %v567 = vunpack.c.h.b16 %v140
    %v568 = vunpack.c.l.b16 %v141
    %v569 = vunpack.c.h.b16 %v141
    %v570 = vunpack.c.l.b16 %v142
    %v571 = vunpack.c.h.b16 %v142
    %v572 = vunpack.c.l.b16 %v143
    %v573 = vunpack.c.h.b16 %v143
    %v574 = vunpack.c.l.b16 %v144
    %v575 = vunpack.c.h.b16 %v144
    %v576 = vunpack.c.l.b16 %v145
    %v577 = vunpack.c.h.b16 %v145
    %v578 = vunpack.c.l.b16 %v146
    %v579 = vunpack.c.h.b16 %v146
    %v580 = vunpack.c.l.b16 %v147
    %v581 = vunpack.c.h.b16 %v147
    %v582 = vunpack.c.l.b16 %v148
    %v583 = vunpack.c.h.b16 %v148
    %v584 = vunpack.c.l.b16 %v149
    %v585 = vunpack.c.h.b16 %v149
    %v586 = vunpack.c.l.b16 %v150
    %v587 = vunpack.c.h.b16 %v150
    %v588 = vunpack.c.l.b16 %v151
    %v589 = vunpack.c.h.b16 %v151
    %v590 = vunpack.c.l.b16 %v152
    %v591 = vunpack.c.h.b16 %v152
    %v592 = vunpack.c.l.b16 %v153
    %v593 = vunpack.c.h.b16 %v153
    %v594 = vunpack.c.l.b16 %v154
    %v595 = vunpack.c.h.b16 %v154
    %v596 = vunpack.c.l.b16 %v155
    %v597 = vunpack.c.h.b16 %v155
    %v598 = vunpack.c.l.b16 %v156
    %v599 = vunpack.c.h.b16 %v156
    %v600 = vunpack.c.l.b16 %v157
    %v601 = vunpack.c.h.b16 %v157
    %v602 = vunpack.c.l.b16 %v158
    %v603 = vunpack.c.h.b16 %v158
    %v604 = vunpack.c.l.b16 %v159
    %v605 = vunpack.c.h.b16 %v159
    %v606 = vunpack.c.l.b16 %v160
    %v607 = vunpack.c.h.b16 %v160
    %v608 = vunpack.c.l.b16 %v161
    %v609 = vunpack.c.h.b16 %v161
    %v610 = vunpack.c.l.b16 %v162
    %v611 = vunpack.c.h.b16 %v162
    %v612 = vunpack.c.l.b16 %v163
    %v613 = vunpack.c.h.b16 %v163
    %v614 = vunpack.c.l.b16 %v164
    %v615 = vunpack.c.h.b16 %v164
    %v616 = vunpack.c.l.b16 %v165
    %v617 = vunpack.c.h.b16 %v165
    %v618 = vunpack.c.l.b16 %v166
    %v619 = vunpack.c.h.b16 %v166
    %v620 = vunpack.c.l.b16 %v167
    %v621 = vunpack.c.h.b16 %v167
    %v622 = vunpack.c.l.b16 %v168
    %v623 = vunpack.c.h.b16 %v168
    %v624 = vunpack.c.l.b16 %v169
    %v625 = vunpack.c.h.b16 %v169
    %v626 = vunpack.c.l.b16 %v170
    %v627 = vunpack.c.h.b16 %v170
    %v628 = vunpack.c.l.b16 %v171
    %v629 = vunpack.c.h.b16 %v171
    %v630 = vunpack.c.l.b16 %v172
    %v631 = vunpack.c.h.b16 %v172
    %v632 = vunpack.c.l.b16 %v173
    %v633 = vunpack.c.h.b16 %v173
    %v634 = vunpack.c.l.b16 %v174
    %v635 = vunpack.c.h.b16 %v174
    %v636 = vunpack.c.l.b16 %v175
    %v637 = vunpack.c.h.b16 %v175
    %v638 = vunpack.c.l.b16 %v176
    %v639 = vunpack.c.h.b16 %v176
    %v640 = vunpack.c.l.b16 %v177
    %v641 = vunpack.c.h.b16 %v177
    %v642 = vunpack.c.l.b16 %v178
    %v643 = vunpack.c.h.b16 %v178
    %v644 = vunpack.c.l.b16 %v179
    %v645 = vunpack.c.h.b16 %v179
    %v646 = vunpack.c.l.b16 %v180
    %v647 = vunpack.c.h.b16 %v180
    %v648 = vunpack.c.l.b16 %v181
    %v649 = vunpack.c.h.b16 %v181
    %v650 = vunpack.c.l.b16 %v182
    %v651 = vunpack.c.h.b16 %v182
    %v652 = vunpack.c.l.b16 %v183
    %v653 = vunpack.c.h.b16 %v183
    %v654 = vunpack.c.l.b16 %v184
    %v655 = vunpack.c.h.b16 %v184
    %v656 = vunpack.c.l.b16 %v185
    %v657 = vunpack.c.h.b16 %v185
    %v658 = vunpack.c.l.b16 %v186
    %v659 = vunpack.c.h.b16 %v186
    %v660 = vunpack.c.l.b16 %v187
    %v661 = vunpack.c.h.b16 %v187
    %v662 = vunpack.c.l.b16 %v188
    %v663 = vunpack.c.h.b16 %v188
    %v664 = vunpack.c.l.b16 %v189
    %v665 = vunpack.c.h.b16 %v189
    %v666 = vunpack.c.l.b16 %v190
    %v667 = vunpack.c.h.b16 %v190
    %v668 = vunpack.c.l.b16 %v191
    %v669 = vunpack.c.h.b16 %v191
    %v670 = vunpack.c.l.b16 %v192
    %v671 = vunpack.c.h.b16 %v192
    %v672 = vunpack.c.l.b16 %v193
    %v673 = vunpack.c.h.b16 %v193
    %v674 = vunpack.c.l.b16 %v194
    %v675 = vunpack.c.h.b16 %v194
    %v676 = vunpack.c.l.b16 %v195
    %v677 = vunpack.c.h.b16 %v195
    %v678 = vunpack.c.l.b16 %v196
    %v679 = vunpack.c.h.b16 %v196
    %v680 = vunpack.c.l.b16 %v197
    %v681 = vunpack.c.h.b16 %v197
    %v682 = vunpack.c.l.b16 %v198
    %v683 = vunpack.c.h.b16 %v198
    %v684 = vunpack.c.l.b16 %v199
    %v685 = vunpack.c.h.b16 %v199
    %v686 = vunpack.c.l.b16 %v200
    %v687 = vunpack.c.h.b16 %v200
    %v688 = vunpack.c.l.b16 %v201
    %v689 = vunpack.c.h.b16 %v201
    %v690 = vunpack.c.l.b16 %v202
    %v691 = vunpack.c.h.b16 %v202
    %v692 = vunpack.c.l.b16 %v203
    %v693 = vunpack.c.h.b16 %v203
    %v694 = vunpack.c.l.b16 %v204
    %v695 = vunpack.c.h.b16 %v204
    %v696 = vunpack.c.l.b16 %v205
    %v697 = vunpack.c.h.b16 %v205
    %v698 = vunpack.c.l.b16 %v206
    %v699 = vunpack.c.h.b16 %v206
    %v700 = vunpack.c.l.b16 %v207
    %v701 = vunpack.c.h.b16 %v207
    %v702 = vunpack.c.l.b16 %v208
    %v703 = vunpack.c.h.b16 %v208
    %v704 = vunpack.c.l.b16 %v209
    %v705 = vunpack.c.h.b16 %v209
    %v706 = vunpack.c.l.b16 %v210
    %v707 = vunpack.c.h.b16 %v210
    %v708 = vunpack.c.l.b16 %v211
    %v709 = vunpack.c.h.b16 %v211
    %v710 = vunpack.c.l.b16 %v212
    %v711 = vunpack.c.h.b16 %v212
    %v712 = vunpack.c.l.b16 %v213
    %v713 = vunpack.c.h.b16 %v213
    %v714 = vunpack.c.l.b16 %v214
    %v715 = vunpack.c.h.b16 %v214
    %v716 = vunpack.c.l.b16 %v215
    %v717 = vunpack.c.h.b16 %v215
    %v718 = vunpack.c.l.b16 %v216
    %v719 = vunpack.c.h.b16 %v216
    %v720 = vunpack.c.l.b16 %v217
    %v721 = vunpack.c.h.b16 %v217
    %v722 = vunpack.c.l.b16 %v218
    %v723 = vunpack.c.h.b16 %v218
    %v724 = vunpack.c.l.b16 %v219
    %v725 = vunpack.c.h.b16 %v219
    %v726 = vunpack.c.l.b16 %v220
    %v727 = vunpack.c.h.b16 %v220
    %v728 = vunpack.c.l.b16 %v221
    %v729 = vunpack.c.h.b16 %v221
    %v730 = vunpack.c.l.b16 %v222
    %v731 = vunpack.c.h.b16 %v222
    %v732 = vunpack.c.l.b16 %v223
    %v733 = vunpack.c.h.b16 %v223
    %v734 = vunpack.c.l.b16 %v224
    %v735 = vunpack.c.h.b16 %v224
    %v736 = vunpack.c.l.b16 %v225
    %v737 = vunpack.c.h.b16 %v225
    %v738 = vunpack.c.l.b16 %v226
    %v739 = vunpack.c.h.b16 %v226
    %v740 = vunpack.c.l.b16 %v227
    %v741 = vunpack.c.h.b16 %v227
    %v742 = vunpack.c.l.b16 %v228
    %v743 = vunpack.c.h.b16 %v228
    %v744 = vunpack.c.l.b16 %v229
    %v745 = vunpack.c.h.b16 %v229
    %v746 = vunpack.c.l.b16 %v230
    %v747 = vunpack.c.h.b16 %v230
    %v748 = vunpack.c.l.b16 %v231
    %v749 = vunpack.c.h.b16 %v231
    %v750 = vunpack.c.l.b16 %v232
    %v751 = vunpack.c.h.b16 %v232
    %v752 = vunpack.c.l.b16 %v233
    %v753 = vunpack.c.h.b16 %v233
    %v754 = vunpack.c.l.b16 %v234
    %v755 = vunpack.c.h.b16 %v234
    %v756 = vunpack.c.l.b16 %v235
    %v757 = vunpack.c.h.b16 %v235
    %v758 = vunpack.c.l.b16 %v236
    %v759 = vunpack.c.h.b16 %v236
    %v760 = vunpack.c.l.b16 %v237
    %v761 = vunpack.c.h.b16 %v237
    %v762 = vunpack.c.l.b16 %v238
    %v763 = vunpack.c.h.b16 %v238
    %v764 = vunpack.c.l.b16 %v239
    %v765 = vunpack.c.h.b16 %v239
    %v766 = vunpack.c.l.b16 %v240
    %v767 = vunpack.c.h.b16 %v240
    %v768 = vunpack.c.l.b16 %v241
    %v769 = vunpack.c.h.b16 %v241
    %v770 = vunpack.c.l.b16 %v242
    %v771 = vunpack.c.h.b16 %v242
    %v772 = vunpack.c.l.b16 %v243
    %v773 = vunpack.c.h.b16 %v243
    %v774 = vunpack.c.l.b16 %v244
    %v775 = vunpack.c.h.b16 %v244
    %v776 = vunpack.c.l.b16 %v245
    %v777 = vunpack.c.h.b16 %v245
    %v778 = vunpack.c.l.b16 %v246
    %v779 = vunpack.c.h.b16 %v246
    %v780 = vunpack.c.l.b16 %v247
    %v781 = vunpack.c.h.b16 %v247
    %v782 = vunpack.c.l.b16 %v248
    %v783 = vunpack.c.h.b16 %v248
    %v784 = vunpack.c.l.b16 %v249
    %v785 = vunpack.c.h.b16 %v249
    %v786 = vunpack.c.l.b16 %v250
    %v787 = vunpack.c.h.b16 %v250
    %v788 = vunpack.c.l.b16 %v251
    %v789 = vunpack.c.h.b16 %v251
    %v790 = vunpack.c.l.b16 %v252
    %v791 = vunpack.c.h.b16 %v252
    %v792 = vunpack.c.l.b16 %v253
    %v793 = vunpack.c.h.b16 %v253
    %v794 = vunpack.c.l.b16 %v254
    %v795 = vunpack.c.h.b16 %v254
    %v796 = vunpack.c.l.b16 %v255
    %v797 = vunpack.c.h.b16 %v255
    %v798 = vunpack.c.l.b16 %v256
    %v799 = vunpack.c.h.b16 %v256
    %v800 = vunpack.c.l.b16 %v257
    %v801 = vunpack.c.h.b16 %v257
    %v802 = vunpack.c.l.b16 %v258
    %v803 = vunpack.c.h.b16 %v258
    %v804 = vunpack.c.l.b16 %v259
    %v805 = vunpack.c.h.b16 %v259
    %v806 = vunpack.c.l.b16 %v260
    %v807 = vunpack.c.h.b16 %v260
    %v808 = vunpack.c.l.b16 %v261
    %v809 = vunpack.c.h.b16 %v261
    %v810 = vunpack.c.l.b16 %v262
    %v811 = vunpack.c.h.b16 %v262
    %v812 = vunpack.c.l.b16 %v263
    %v813 = vunpack.c.h.b16 %v263
    %v814 = vunpack.c.l.b16 %v264
    %v815 = vunpack.c.h.b16 %v264
    %v816 = vunpack.c.l.b16 %v265
    %v817 = vunpack.c.h.b16 %v265
    %v818 = vunpack.c.l.b16 %v266
    %v819 = vunpack.c.h.b16 %v266
    %v820 = vunpack.c.l.b16 %v267
    %v821 = vunpack.c.h.b16 %v267
    %v822 = vunpack.c.l.b16 %v268
    %v823 = vunpack.c.h.b16 %v268
    %v824 = vunpack.c.l.b16 %v269
    %v825 = vunpack.c.h.b16 %v269
    %v826 = vunpack.c.l.b16 %v270
    %v827 = vunpack.c.h.b16 %v270
    %v828 = vunpack.c.l.b16 %v271
    %v829 = vunpack.c.h.b16 %v271
    %v830 = vunpack.c.l.b16 %v272
    %v831 = vunpack.c.h.b16 %v272
    %v832 = vunpack.c.l.b16 %v273
    %v833 = vunpack.c.h.b16 %v273
    %v834 = vunpack.c.l.b16 %v274
    %v835 = vunpack.c.h.b16 %v274
    %v836 = vunpack.c.l.b16 %v275
    %v837 = vunpack.c.h.b16 %v275
    %v838 = vunpack.c.l.b16 %v276
    %v839 = vunpack.c.h.b16 %v276
    %v840 = vunpack.c.l.b16 %v277
    %v841 = vunpack.c.h.b16 %v277
    %v842 = vunpack.c.l.b16 %v278
    %v843 = vunpack.c.h.b16 %v278
    %v844 = vunpack.c.l.b16 %v279
    %v845 = vunpack.c.h.b16 %v279
    %v846 = vunpack.c.l.b16 %v280
    %v847 = vunpack.c.h.b16 %v280
    %v848 = vunpack.c.l.b16 %v281
    %v849 = vunpack.c.h.b16 %v281
    %v850 = vunpack.c.l.b16 %v282
    %v851 = vunpack.c.h.b16 %v282
    %v852 = vunpack.c.l.b16 %v283
    %v853 = vunpack.c.h.b16 %v283
    %v854 = vunpack.c.l.b16 %v284
    %v855 = vunpack.c.h.b16 %v284
    %v856 = vunpack.c.l.b16 %v285
    %v857 = vunpack.c.h.b16 %v285
    %v858 = vunpack.c.l.b16 %v286
    %v859 = vunpack.c.h.b16 %v286
    %v860 = vunpack.c.l.b16 %v287
    %v861 = vunpack.c.h.b16 %v287
    %v862 = vunpack.c.l.b16 %v288
    %v863 = vunpack.c.h.b16 %v288
    %v864 = vunpack.c.l.b16 %v289
    %v865 = vunpack.c.h.b16 %v289
    %v866 = vpack.c.b16 %v486, %v482
    %v867 = vpack.c.b16 %v487, %v483
    %v868 = vpack.c.b16 %v488, %v484
    %v869 = vpack.c.b16 %v489, %v485
    %v870 = vpack.c.b16 %v494, %v490
    %v871 = vpack.c.b16 %v495, %v491
    %v872 = vpack.c.b16 %v496, %v492
    %v873 = vpack.c.b16 %v497, %v493
    %v874 = vpack.c.b16 %v502, %v498
    %v875 = vpack.c.b16 %v503, %v499
    %v876 = vpack.c.b16 %v504, %v500
    %v877 = vpack.c.b16 %v505, %v501
    %v878 = vpack.c.b16 %v510, %v506
    %v879 = vpack.c.b16 %v511, %v507
    %v880 = vpack.c.b16 %v512, %v508
    %v881 = vpack.c.b16 %v513, %v509
    %v882 = vpack.c.b16 %v518, %v514
    %v883 = vpack.c.b16 %v519, %v515
    %v884 = vpack.c.b16 %v520, %v516
    %v885 = vpack.c.b16 %v521, %v517
    %v886 = vpack.c.b16 %v526, %v522
    %v887 = vpack.c.b16 %v527, %v523
    %v888 = vpack.c.b16 %v528, %v524
    %v889 = vpack.c.b16 %v529, %v525
    %v890 = vpack.c.b16 %v534, %v530
    %v891 = vpack.c.b16 %v535, %v531
    %v892 = vpack.c.b16 %v536, %v532
    %v893 = vpack.c.b16 %v537, %v533
    %v894 = vpack.c.b16 %v542, %v538
    %v895 = vpack.c.b16 %v543, %v539
    %v896 = vpack.c.b16 %v544, %v540
    %v897 = vpack.c.b16 %v545, %v541
    %v898 = vpack.c.b16 %v550, %v546
    %v899 = vpack.c.b16 %v551, %v547
    %v900 = vpack.c.b16 %v552, %v548
    %v901 = vpack.c.b16 %v553, %v549
    %v902 = vpack.c.b16 %v558, %v554
    %v903 = vpack.c.b16 %v559, %v555
    %v904 = vpack.c.b16 %v560, %v556
    %v905 = vpack.c.b16 %v561, %v557
    %v906 = vpack.c.b16 %v566, %v562
    %v907 = vpack.c.b16 %v567, %v563
    %v908 = vpack.c.b16 %v568, %v564
    %v909 = vpack.c.b16 %v569, %v565
    %v910 = vpack.c.b16 %v574, %v570
    %v911 = vpack.c.b16 %v575, %v571
    %v912 = vpack.c.b16 %v576, %v572
    %v913 = vpack.c.b16 %v577, %v573
    %v914 = vpack.c.b16 %v582, %v578
    %v915 = vpack.c.b16 %v583, %v579
    %v916 = vpack.c.b16 %v584, %v580
    %v917 = vpack.c.b16 %v585, %v581
    %v918 = vpack.c.b16 %v590, %v586
    %v919 = vpack.c.b16 %v591, %v587
    %v920 = vpack.c.b16 %v592, %v588
    %v921 = vpack.c.b16 %v593, %v589
    %v922 = vpack.c.b16 %v598, %v594
    %v923 = vpack.c.b16 %v599, %v595
    %v924 = vpack.c.b16 %v600, %v596
    %v925 = vpack.c.b16 %v601, %v597
    %v926 = vpack.c.b16 %v606, %v602
    %v927 = vpack.c.b16 %v607, %v603
    %v928 = vpack.c.b16 %v608, %v604
    %v929 = vpack.c.b16 %v609, %v605
    %v930 = vpack.c.b16 %v614, %v610
    %v931 = vpack.c.b16 %v615, %v611
    %v932 = vpack.c.b16 %v616, %v612
    %v933 = vpack.c.b16 %v617, %v613
    %v934 = vpack.c.b16 %v622, %v618
    %v935 = vpack.c.b16 %v623, %v619
    %v936 = vpack.c.b16 %v624, %v620
    %v937 = vpack.c.b16 %v625, %v621
    %v938 = vpack.c.b16 %v630, %v626
    %v939 = vpack.c.b16 %v631, %v627
    %v940 = vpack.c.b16 %v632, %v628
    %v941 = vpack.c.b16 %v633, %v629
    %v942 = vpack.c.b16 %v638, %v634
    %v943 = vpack.c.b16 %v639, %v635
    %v944 = vpack.c.b16 %v640, %v636
    %v945 = vpack.c.b16 %v641, %v637
    %v946 = vpack.c.b16 %v646, %v642
    %v947 = vpack.c.b16 %v647, %v643
    %v948 = vpack.c.b16 %v648, %v644
    %v949 = vpack.c.b16 %v649, %v645
    %v950 = vpack.c.b16 %v654, %v650
    %v951 = vpack.c.b16 %v655, %v651
    %v952 = vpack.c.b16 %v656, %v652
    %v953 = vpack.c.b16 %v657, %v653
    %v954 = vpack.c.b16 %v662, %v658
    %v955 = vpack.c.b16 %v663, %v659
    %v956 = vpack.c.b16 %v664, %v660
    %v957 = vpack.c.b16 %v665, %v661
    %v958 = vpack.c.b16 %v670, %v666
    %v959 = vpack.c.b16 %v671, %v667
    %v960 = vpack.c.b16 %v672, %v668
    %v961 = vpack.c.b16 %v673, %v669
    %v962 = vpack.c.b16 %v678, %v674
    %v963 = vpack.c.b16 %v679, %v675
    %v964 = vpack.c.b16 %v680, %v676
    %v965 = vpack.c.b16 %v681, %v677
    %v966 = vpack.c.b16 %v686, %v682
    %v967 = vpack.c.b16 %v687, %v683
    %v968 = vpack.c.b16 %v688, %v684
    %v969 = vpack.c.b16 %v689, %v685
    %v970 = vpack.c.b16 %v694, %v690
    %v971 = vpack.c.b16 %v695, %v691
    %v972 = vpack.c.b16 %v696, %v692
    %v973 = vpack.c.b16 %v697, %v693
    %v974 = vpack.c.b16 %v702, %v698
    %v975 = vpack.c.b16 %v703, %v699
    %v976 = vpack.c.b16 %v704, %v700
    %v977 = vpack.c.b16 %v705, %v701
    %v978 = vpack.c.b16 %v710, %v706
    %v979 = vpack.c.b16 %v711, %v707
    %v980 = vpack.c.b16 %v712, %v708
    %v981 = vpack.c.b16 %v713, %v709
    %v982 = vpack.c.b16 %v718, %v714
    %v983 = vpack.c.b16 %v719, %v715
    %v984 = vpack.c.b16 %v720, %v716
    %v985 = vpack.c.b16 %v721, %v717
    %v986 = vpack.c.b16 %v726, %v722
    %v987 = vpack.c.b16 %v727, %v723
    %v988 = vpack.c.b16 %v728, %v724
    %v989 = vpack.c.b16 %v729, %v725
    %v990 = vpack.c.b16 %v734, %v730
    %v991 = vpack.c.b16 %v735, %v731
    %v992 = vpack.c.b16 %v736, %v732
    %v993 = vpack.c.b16 %v737, %v733
    %v994 = vpack.c.b16 %v742, %v738
    %v995 = vpack.c.b16 %v743, %v739
    %v996 = vpack.c.b16 %v744, %v740
    %v997 = vpack.c.b16 %v745, %v741
    %v998 = vpack.c.b16 %v750, %v746
    %v999 = vpack.c.b16 %v751, %v747
    %v1000 = vpack.c.b16 %v752, %v748
    %v1001 = vpack.c.b16 %v753, %v749
    %v1002 = vpack.c.b16 %v758, %v754
    %v1003 = vpack.c.b16 %v759, %v755
    %v1004 = vpack.c.b16 %v760, %v756
    %v1005 = vpack.c.b16 %v761, %v757
    %v1006 = vpack.c.b16 %v766, %v762
    %v1007 = vpack.c.b16 %v767, %v763
    %v1008 = vpack.c.b16 %v768, %v764
    %v1009 = vpack.c.b16 %v769, %v765
    %v1010 = vpack.c.b16 %v774, %v770
    %v1011 = vpack.c.b16 %v775, %v771
    %v1012 = vpack.c.b16 %v776, %v772
    %v1013 = vpack.c.b16 %v777, %v773
    %v1014 = vpack.c.b16 %v782, %v778
    %v1015 = vpack.c.b16 %v783, %v779
    %v1016 = vpack.c.b16 %v784, %v780
    %v1017 = vpack.c.b16 %v785, %v781
    %v1018 = vpack.c.b16 %v790, %v786
    %v1019 = vpack.c.b16 %v791, %v787
    %v1020 = vpack.c.b16 %v792, %v788
    %v1021 = vpack.c.b16 %v793, %v789
    %v1022 = vpack.c.b16 %v798, %v794
    %v1023 = vpack.c.b16 %v799, %v795
    %v1024 = vpack.c.b16 %v800, %v796
    %v1025 = vpack.c.b16 %v801, %v797
    %v1026 = vpack.c.b16 %v806, %v802
    %v1027 = vpack.c.b16 %v807, %v803
    %v1028 = vpack.c.b16 %v808, %v804
    %v1029 = vpack.c.b16 %v809, %v805
    %v1030 = vpack.c.b16 %v814, %v810
    %v1031 = vpack.c.b16 %v815, %v811
    %v1032 = vpack.c.b16 %v816, %v812
    %v1033 = vpack.c.b16 %v817, %v813
    %v1034 = vpack.c.b16 %v822, %v818
    %v1035 = vpack.c.b16 %v823, %v819
    %v1036 = vpack.c.b16 %v824, %v820
    %v1037 = vpack.c.b16 %v825, %v821
    %v1038 = vpack.c.b16 %v830, %v826
    %v1039 = vpack.c.b16 %v831, %v827
    %v1040 = vpack.c.b16 %v832, %v828
    %v1041 = vpack.c.b16 %v833, %v829
    %v1042 = vpack.c.b16 %v838, %v834
    %v1043 = vpack.c.b16 %v839, %v835
    %v1044 = vpack.c.b16 %v840, %v836
    %v1045 = vpack.c.b16 %v841, %v837
    %v1046 = vpack.c.b16 %v846, %v842
    %v1047 = vpack.c.b16 %v847, %v843
    %v1048 = vpack.c.b16 %v848, %v844
    %v1049 = vpack.c.b16 %v849, %v845
    %v1050 = vpack.c.b16 %v854, %v850
    %v1051 = vpack.c.b16 %v855, %v851
    %v1052 = vpack.c.b16 %v856, %v852
    %v1053 = vpack.c.b16 %v857, %v853
    %v1054 = vpack.c.b16 %v862, %v858
    %v1055 = vpack.c.b16 %v863, %v859
    %v1056 = vpack.c.b16 %v864, %v860
    %v1057 = vpack.c.b16 %v865, %v861
    %1250 = vmatprep.subr.bf16.mxu0 %v867
    %1251 = vmatpush1.bf16.msra.mxu0 %v866
    %1252 = vmatprep.subr.bf16.mxu0 %v871
    %1253 = vmatpush1.bf16.msra.mxu0 %v870
    %1254 = vmatprep.subr.bf16.mxu0 %v875
    %1255 = vmatpush1.bf16.msra.mxu0 %v874
    %1256 = vmatprep.subr.bf16.mxu0 %v879
    %1257 = vmatpush1.bf16.msra.mxu0 %v878
    %1258 = vmatprep.subr.bf16.mxu0 %v883
    %1259 = vmatpush1.bf16.msra.mxu0 %v882
    %1260 = vmatprep.subr.bf16.mxu0 %v887
    %1261 = vmatpush1.bf16.msra.mxu0 %v886
    %1262 = vmatprep.subr.bf16.mxu0 %v891
    %1263 = vmatpush1.bf16.msra.mxu0 %v890
    %1264 = vmatprep.subr.bf16.mxu0 %v895
    %1265 = vmatpush1.bf16.msra.mxu0 %v894
    %1266 = vmatprep.subr.bf16.mxu0 %v899
    %1267 = vmatpush1.bf16.msra.mxu0 %v898
    %1268 = vmatprep.subr.bf16.mxu0 %v903
    %1269 = vmatpush1.bf16.msra.mxu0 %v902
    %1270 = vmatprep.subr.bf16.mxu0 %v907
    %1271 = vmatpush1.bf16.msra.mxu0 %v906
    %1272 = vmatprep.subr.bf16.mxu0 %v911
    %1273 = vmatpush1.bf16.msra.mxu0 %v910
    %1274 = vmatprep.subr.bf16.mxu0 %v915
    %1275 = vmatpush1.bf16.msra.mxu0 %v914
    %1276 = vmatprep.subr.bf16.mxu0 %v919
    %1277 = vmatpush1.bf16.msra.mxu0 %v918
    %1278 = vmatprep.subr.bf16.mxu0 %v923
    %1279 = vmatpush1.bf16.msra.mxu0 %v922
    %1280 = vmatprep.subr.bf16.mxu0 %v927
    %1281 = vmatpush1.bf16.msra.mxu0 %v926
    %1282 = vmatprep.mubr.bf16.mxu0 %v93
    %1283 = vmatmul.mubr.bf16.gmra.mrb[0].mxu0 %v92
    %v1284 = vpop.f32.mrb[0].mxu0
    %v1285 = vadd.f32 0.0, %v1284
    %v1286 = vpop.f32.mrb[0].mxu0
    %v1287 = vadd.f32 0.0, %v1286
    %v1288 = vpop.f32.mrb[0].mxu0
    %v1289 = vadd.f32 0.0, %v1288
    %v1290 = vpop.f32.mrb[0].mxu0
    %v1291 = vadd.f32 0.0, %v1290
    %1292 = vdwg.mxu0
    %1293 = vmatprep.subr.bf16.mxu0 %v931
    %1294 = vmatpush1.bf16.msra.mxu0 %v930
    %1295 = vmatprep.subr.bf16.mxu0 %v935
    %1296 = vmatpush1.bf16.msra.mxu0 %v934
    %1297 = vmatprep.subr.bf16.mxu0 %v939
    %1298 = vmatpush1.bf16.msra.mxu0 %v938
    %1299 = vmatprep.subr.bf16.mxu0 %v943
    %1300 = vmatpush1.bf16.msra.mxu0 %v942
    %1301 = vmatprep.subr.bf16.mxu0 %v947
    %1302 = vmatpush1.bf16.msra.mxu0 %v946
    %1303 = vmatprep.subr.bf16.mxu0 %v951
    %1304 = vmatpush1.bf16.msra.mxu0 %v950
    %1305 = vmatprep.subr.bf16.mxu0 %v955
    %1306 = vmatpush1.bf16.msra.mxu0 %v954
    %1307 = vmatprep.subr.bf16.mxu0 %v959
    %1308 = vmatpush1.bf16.msra.mxu0 %v958
    %1309 = vmatprep.subr.bf16.mxu0 %v963
    %1310 = vmatpush1.bf16.msra.mxu0 %v962
    %1311 = vmatprep.subr.bf16.mxu0 %v967
    %1312 = vmatpush1.bf16.msra.mxu0 %v966
    %1313 = vmatprep.subr.bf16.mxu0 %v971
    %1314 = vmatpush1.bf16.msra.mxu0 %v970
    %1315 = vmatprep.subr.bf16.mxu0 %v975
    %1316 = vmatpush1.bf16.msra.mxu0 %v974
    %1317 = vmatprep.subr.bf16.mxu0 %v979
    %1318 = vmatpush1.bf16.msra.mxu0 %v978
    %1319 = vmatprep.subr.bf16.mxu0 %v983
    %1320 = vmatpush1.bf16.msra.mxu0 %v982
    %1321 = vmatprep.subr.bf16.mxu0 %v987
    %1322 = vmatpush1.bf16.msra.mxu0 %v986
    %1323 = vmatprep.subr.bf16.mxu0 %v991
    %1324 = vmatpush1.bf16.msra.mxu0 %v990
    %1325 = vmatprep.mubr.bf16.mxu0 %v95
    %1326 = vmatmul.mubr.bf16.gmra.mrb[0].mxu0 %v94
    %v1327 = vpop.f32.mrb[0].mxu0
    %v1328 = vadd.f32 %v1285, %v1327
    %v1329 = vpop.f32.mrb[0].mxu0
    %v1330 = vadd.f32 %v1287, %v1329
    %v1331 = vpop.f32.mrb[0].mxu0
    %v1332 = vadd.f32 %v1289, %v1331
    %v1333 = vpop.f32.mrb[0].mxu0
    %v1334 = vadd.f32 %v1291, %v1333
    %1335 = vdwg.mxu0
    %1336 = vmatprep.subr.bf16.mxu0 %v995
    %1337 = vmatpush1.bf16.msra.mxu0 %v994
    %1338 = vmatprep.subr.bf16.mxu0 %v999
    %1339 = vmatpush1.bf16.msra.mxu0 %v998
    %1340 = vmatprep.subr.bf16.mxu0 %v1003
    %1341 = vmatpush1.bf16.msra.mxu0 %v1002
    %1342 = vmatprep.subr.bf16.mxu0 %v1007
    %1343 = vmatpush1.bf16.msra.mxu0 %v1006
    %1344 = vmatprep.subr.bf16.mxu0 %v1011
    %1345 = vmatpush1.bf16.msra.mxu0 %v1010
    %1346 = vmatprep.subr.bf16.mxu0 %v1015
    %1347 = vmatpush1.bf16.msra.mxu0 %v1014
    %1348 = vmatprep.subr.bf16.mxu0 %v1019
    %1349 = vmatpush1.bf16.msra.mxu0 %v1018
    %1350 = vmatprep.subr.bf16.mxu0 %v1023
    %1351 = vmatpush1.bf16.msra.mxu0 %v1022
    %1352 = vmatprep.subr.bf16.mxu0 %v1027
    %1353 = vmatpush1.bf16.msra.mxu0 %v1026
    %1354 = vmatprep.subr.bf16.mxu0 %v1031
    %1355 = vmatpush1.bf16.msra.mxu0 %v1030
    %1356 = vmatprep.subr.bf16.mxu0 %v1035
    %1357 = vmatpush1.bf16.msra.mxu0 %v1034
    %1358 = vmatprep.subr.bf16.mxu0 %v1039
    %1359 = vmatpush1.bf16.msra.mxu0 %v1038
    %1360 = vmatprep.subr.bf16.mxu0 %v1043
    %1361 = vmatpush1.bf16.msra.mxu0 %v1042
    %1362 = vmatprep.subr.bf16.mxu0 %v1047
    %1363 = vmatpush1.bf16.msra.mxu0 %v1046
    %1364 = vmatprep.subr.bf16.mxu0 %v1051
    %1365 = vmatpush1.bf16.msra.mxu0 %v1050
    %1366 = vmatprep.subr.bf16.mxu0 %v1055
    %1367 = vmatpush1.bf16.msra.mxu0 %v1054
    %1368 = vmatprep.mubr.bf16.mxu0 %v97
    %1369 = vmatmul.mubr.bf16.gmra.mrb[0].mxu0 %v96
    %v1370 = vpop.f32.mrb[0].mxu0
    %v1371 = vadd.f32 %v1328, %v1370
    %v1372 = vpop.f32.mrb[0].mxu0
    %v1373 = vadd.f32 %v1330, %v1372
    %v1374 = vpop.f32.mrb[0].mxu0
    %v1375 = vadd.f32 %v1332, %v1374
    %v1376 = vpop.f32.mrb[0].mxu0
    %v1377 = vadd.f32 %v1334, %v1376
    %1378 = vdwg.mxu0
    %1379 = vmatprep.subr.bf16.mxu0 %v869
    %1380 = vmatpush1.bf16.msra.mxu0 %v868
    %1381 = vmatprep.subr.bf16.mxu0 %v873
    %1382 = vmatpush1.bf16.msra.mxu0 %v872
    %1383 = vmatprep.subr.bf16.mxu0 %v877
    %1384 = vmatpush1.bf16.msra.mxu0 %v876
    %1385 = vmatprep.subr.bf16.mxu0 %v881
    %1386 = vmatpush1.bf16.msra.mxu0 %v880
    %1387 = vmatprep.subr.bf16.mxu0 %v885
    %1388 = vmatpush1.bf16.msra.mxu0 %v884
    %1389 = vmatprep.subr.bf16.mxu0 %v889
    %1390 = vmatpush1.bf16.msra.mxu0 %v888
    %1391 = vmatprep.subr.bf16.mxu0 %v893
    %1392 = vmatpush1.bf16.msra.mxu0 %v892
    %1393 = vmatprep.subr.bf16.mxu0 %v897
    %1394 = vmatpush1.bf16.msra.mxu0 %v896
    %1395 = vmatprep.subr.bf16.mxu0 %v901
    %1396 = vmatpush1.bf16.msra.mxu0 %v900
    %1397 = vmatprep.subr.bf16.mxu0 %v905
    %1398 = vmatpush1.bf16.msra.mxu0 %v904
    %1399 = vmatprep.subr.bf16.mxu0 %v909
    %1400 = vmatpush1.bf16.msra.mxu0 %v908
    %1401 = vmatprep.subr.bf16.mxu0 %v913
    %1402 = vmatpush1.bf16.msra.mxu0 %v912
    %1403 = vmatprep.subr.bf16.mxu0 %v917
    %1404 = vmatpush1.bf16.msra.mxu0 %v916
    %1405 = vmatprep.subr.bf16.mxu0 %v921
    %1406 = vmatpush1.bf16.msra.mxu0 %v920
    %1407 = vmatprep.subr.bf16.mxu0 %v925
    %1408 = vmatpush1.bf16.msra.mxu0 %v924
    %1409 = vmatprep.subr.bf16.mxu0 %v929
    %1410 = vmatpush1.bf16.msra.mxu0 %v928
    %1411 = vmatprep.mubr.bf16.mxu0 %v93
    %1412 = vmatmul.mubr.bf16.gmra.mrb[0].mxu0 %v92
    %v1413 = vpop.f32.mrb[0].mxu0
    %v1414 = vadd.f32 0.0, %v1413
    %v1415 = vpop.f32.mrb[0].mxu0
    %v1416 = vadd.f32 0.0, %v1415
    %v1417 = vpop.f32.mrb[0].mxu0
    %v1418 = vadd.f32 0.0, %v1417
    %v1419 = vpop.f32.mrb[0].mxu0
    %v1420 = vadd.f32 0.0, %v1419
    %1421 = vdwg.mxu0
    %1422 = vmatprep.subr.bf16.mxu0 %v933
    %1423 = vmatpush1.bf16.msra.mxu0 %v932
    %1424 = vmatprep.subr.bf16.mxu0 %v937
    %1425 = vmatpush1.bf16.msra.mxu0 %v936
    %1426 = vmatprep.subr.bf16.mxu0 %v941
    %1427 = vmatpush1.bf16.msra.mxu0 %v940
    %1428 = vmatprep.subr.bf16.mxu0 %v945
    %1429 = vmatpush1.bf16.msra.mxu0 %v944
    %1430 = vmatprep.subr.bf16.mxu0 %v949
    %1431 = vmatpush1.bf16.msra.mxu0 %v948
    %1432 = vmatprep.subr.bf16.mxu0 %v953
    %1433 = vmatpush1.bf16.msra.mxu0 %v952
    %1434 = vmatprep.subr.bf16.mxu0 %v957
    %1435 = vmatpush1.bf16.msra.mxu0 %v956
    %1436 = vmatprep.subr.bf16.mxu0 %v961
    %1437 = vmatpush1.bf16.msra.mxu0 %v960
    %1438 = vmatprep.subr.bf16.mxu0 %v965
    %1439 = vmatpush1.bf16.msra.mxu0 %v964
    %1440 = vmatprep.subr.bf16.mxu0 %v969
    %1441 = vmatpush1.bf16.msra.mxu0 %v968
    %1442 = vmatprep.subr.bf16.mxu0 %v973
    %1443 = vmatpush1.bf16.msra.mxu0 %v972
    %1444 = vmatprep.subr.bf16.mxu0 %v977
    %1445 = vmatpush1.bf16.msra.mxu0 %v976
    %1446 = vmatprep.subr.bf16.mxu0 %v981
    %1447 = vmatpush1.bf16.msra.mxu0 %v980
    %1448 = vmatprep.subr.bf16.mxu0 %v985
    %1449 = vmatpush1.bf16.msra.mxu0 %v984
    %1450 = vmatprep.subr.bf16.mxu0 %v989
    %1451 = vmatpush1.bf16.msra.mxu0 %v988
    %1452 = vmatprep.subr.bf16.mxu0 %v993
    %1453 = vmatpush1.bf16.msra.mxu0 %v992
    %1454 = vmatprep.mubr.bf16.mxu0 %v95
    %1455 = vmatmul.mubr.bf16.gmra.mrb[0].mxu0 %v94
    %v1456 = vpop.f32.mrb[0].mxu0
    %v1457 = vadd.f32 %v1414, %v1456
    %v1458 = vpop.f32.mrb[0].mxu0
    %v1459 = vadd.f32 %v1416, %v1458
    %v1460 = vpop.f32.mrb[0].mxu0
    %v1461 = vadd.f32 %v1418, %v1460
    %v1462 = vpop.f32.mrb[0].mxu0
    %v1463 = vadd.f32 %v1420, %v1462
    %1464 = vdwg.mxu0
    %1465 = vmatprep.subr.bf16.mxu0 %v997
    %1466 = vmatpush1.bf16.msra.mxu0 %v996
    %1467 = vmatprep.subr.bf16.mxu0 %v1001
    %1468 = vmatpush1.bf16.msra.mxu0 %v1000
    %1469 = vmatprep.subr.bf16.mxu0 %v1005
    %1470 = vmatpush1.bf16.msra.mxu0 %v1004
    %1471 = vmatprep.subr.bf16.mxu0 %v1009
    %1472 = vmatpush1.bf16.msra.mxu0 %v1008
    %1473 = vmatprep.subr.bf16.mxu0 %v1013
    %1474 = vmatpush1.bf16.msra.mxu0 %v1012
    %1475 = vmatprep.subr.bf16.mxu0 %v1017
    %1476 = vmatpush1.bf16.msra.mxu0 %v1016
    %1477 = vmatprep.subr.bf16.mxu0 %v1021
    %1478 = vmatpush1.bf16.msra.mxu0 %v1020
    %1479 = vmatprep.subr.bf16.mxu0 %v1025
    %1480 = vmatpush1.bf16.msra.mxu0 %v1024
    %1481 = vmatprep.subr.bf16.mxu0 %v1029
    %1482 = vmatpush1.bf16.msra.mxu0 %v1028
    %1483 = vmatprep.subr.bf16.mxu0 %v1033
    %1484 = vmatpush1.bf16.msra.mxu0 %v1032
    %1485 = vmatprep.subr.bf16.mxu0 %v1037
    %1486 = vmatpush1.bf16.msra.mxu0 %v1036
    %1487 = vmatprep.subr.bf16.mxu0 %v1041
    %1488 = vmatpush1.bf16.msra.mxu0 %v1040
    %1489 = vmatprep.subr.bf16.mxu0 %v1045
    %1490 = vmatpush1.bf16.msra.mxu0 %v1044
    %1491 = vmatprep.subr.bf16.mxu0 %v1049
    %1492 = vmatpush1.bf16.msra.mxu0 %v1048
    %1493 = vmatprep.subr.bf16.mxu0 %v1053
    %1494 = vmatpush1.bf16.msra.mxu0 %v1052
    %1495 = vmatprep.subr.bf16.mxu0 %v1057
    %1496 = vmatpush1.bf16.msra.mxu0 %v1056
    %1497 = vmatprep.mubr.bf16.mxu0 %v97
    %1498 = vmatmul.mubr.bf16.gmra.mrb[0].mxu0 %v96
    %v1499 = vpop.f32.mrb[0].mxu0
    %v1500 = vadd.f32 %v1457, %v1499
    %v1501 = vpop.f32.mrb[0].mxu0
    %v1502 = vadd.f32 %v1459, %v1501
    %v1503 = vpop.f32.mrb[0].mxu0
    %v1504 = vadd.f32 %v1461, %v1503
    %v1505 = vpop.f32.mrb[0].mxu0
    %v1506 = vadd.f32 %v1463, %v1505
    %1507 = vdwg.mxu0
    %v1508 = vmul.f32 %v1371, %v1371
    %v1509 = vmul.f32 %v1373, %v1373
    %v1510 = vmul.f32 %v1500, %v1500
    %v1511 = vmul.f32 %v1502, %v1502
    %v1512 = vmul.f32 %v1375, %v1375
    %v1513 = vmul.f32 %v1377, %v1377
    %v1514 = vmul.f32 %v1504, %v1504
    %v1515 = vmul.f32 %v1506, %v1506
    %v1516 = vadd.f32 %v1508, %v1509
    %v1517 = vadd.f32 %v1516, %v1510
    %v1518 = vadd.f32 %v1517, %v1511
    %1519 = vadd.xlane.f32.xlu0 %v1518
    %v1520 = vpop.xlane.xlu0 %1519
    %v1521 = vadd.f32 %v1512, %v1513
    %v1522 = vadd.f32 %v1521, %v1514
    %v1523 = vadd.f32 %v1522, %v1515
    %1524 = vadd.xlane.f32.xlu0 %v1523
    %v1525 = vpop.xlane.xlu0 %1524
    %v1526 = vadd.f32 %v1520, 1e-12
    %v1527 = vadd.f32 %v1525, 1e-12
    %v1528 = vrsqrt.pop %v1526
    %v1529 = vrsqrt.pop %v1527
    %v1530 = vpack.c.bf16 %v1375, %v1371
    %v1531 = vpack.c.bf16 %v1377, %v1373
    %v1532 = vpack.c.bf16 %v1504, %v1500
    %v1533 = vpack.c.bf16 %v1506, %v1502
    %v1534 = vld [vmem:[#allocation7] sm:$0xff]
    %v1535 = vld [vmem:[#allocation7 + $0x8] sm:$0xff]
    %v1536 = vld [vmem:[#allocation7 + $0x10] sm:$0xff]
    %v1537 = vld [vmem:[#allocation7 + $0x18] sm:$0xff]
    %v1538 = vld [vmem:[#allocation7 + $0x20] sm:$0xff]
    %v1539 = vld [vmem:[#allocation7 + $0x28] sm:$0xff]
    %v1540 = vld [vmem:[#allocation7 + $0x30] sm:$0xff]
    %v1541 = vld [vmem:[#allocation7 + $0x38] sm:$0xff]
    %v1542 = vld [vmem:[#allocation7 + $0x40] sm:$0xff]
    %v1543 = vld [vmem:[#allocation7 + $0x48] sm:$0xff]
    %v1544 = vld [vmem:[#allocation7 + $0x50] sm:$0xff]
    %v1545 = vld [vmem:[#allocation7 + $0x58] sm:$0xff]
    %v1546 = vld [vmem:[#allocation7 + $0x60] sm:$0xff]
    %v1547 = vld [vmem:[#allocation7 + $0x68] sm:$0xff]
    %v1548 = vld [vmem:[#allocation7 + $0x70] sm:$0xff]
    %v1549 = vld [vmem:[#allocation7 + $0x78] sm:$0xff]
    %v1550 = vld [vmem:[#allocation7 + $0x80] sm:$0xff]
    %v1551 = vld [vmem:[#allocation7 + $0x88] sm:$0xff]
    %v1552 = vld [vmem:[#allocation7 + $0x90] sm:$0xff]
    %v1553 = vld [vmem:[#allocation7 + $0x98] sm:$0xff]
    %v1554 = vld [vmem:[#allocation7 + $0xa0] sm:$0xff]
    %v1555 = vld [vmem:[#allocation7 + $0xa8] sm:$0xff]
    %v1556 = vld [vmem:[#allocation7 + $0xb0] sm:$0xff]
    %v1557 = vld [vmem:[#allocation7 + $0xb8] sm:$0xff]
    %v1558 = vld [vmem:[#allocation7 + $0xc0] sm:$0xff]
    %v1559 = vld [vmem:[#allocation7 + $0xc8] sm:$0xff]
    %v1560 = vld [vmem:[#allocation7 + $0xd0] sm:$0xff]
    %v1561 = vld [vmem:[#allocation7 + $0xd8] sm:$0xff]
    %v1562 = vld [vmem:[#allocation7 + $0xe0] sm:$0xff]
    %v1563 = vld [vmem:[#allocation7 + $0xe8] sm:$0xff]
    %v1564 = vld [vmem:[#allocation7 + $0xf0] sm:$0xff]
    %v1565 = vld [vmem:[#allocation7 + $0xf8] sm:$0xff]
    %v1566 = vld [vmem:[#allocation7 + $0x100] sm:$0xff]
    %v1567 = vld [vmem:[#allocation7 + $0x108] sm:$0xff]
    %v1568 = vld [vmem:[#allocation7 + $0x110] sm:$0xff]
    %v1569 = vld [vmem:[#allocation7 + $0x118] sm:$0xff]
    %v1570 = vld [vmem:[#allocation7 + $0x120] sm:$0xff]
    %v1571 = vld [vmem:[#allocation7 + $0x128] sm:$0xff]
    %v1572 = vld [vmem:[#allocation7 + $0x130] sm:$0xff]
    %v1573 = vld [vmem:[#allocation7 + $0x138] sm:$0xff]
    %v1574 = vld [vmem:[#allocation7 + $0x140] sm:$0xff]
    %v1575 = vld [vmem:[#allocation7 + $0x148] sm:$0xff]
    %v1576 = vld [vmem:[#allocation7 + $0x150] sm:$0xff]
    %v1577 = vld [vmem:[#allocation7 + $0x158] sm:$0xff]
    %v1578 = vld [vmem:[#allocation7 + $0x160] sm:$0xff]
    %v1579 = vld [vmem:[#allocation7 + $0x168] sm:$0xff]
    %v1580 = vld [vmem:[#allocation7 + $0x170] sm:$0xff]
    %v1581 = vld [vmem:[#allocation7 + $0x178] sm:$0xff]
    %v1582 = vld [vmem:[#allocation7 + $0x180] sm:$0xff]
    %v1583 = vld [vmem:[#allocation7 + $0x188] sm:$0xff]
    %v1584 = vld [vmem:[#allocation7 + $0x190] sm:$0xff]
    %v1585 = vld [vmem:[#allocation7 + $0x198] sm:$0xff]
    %v1586 = vld [vmem:[#allocation7 + $0x1a0] sm:$0xff]
    %v1587 = vld [vmem:[#allocation7 + $0x1a8] sm:$0xff]
    %v1588 = vld [vmem:[#allocation7 + $0x1b0] sm:$0xff]
    %v1589 = vld [vmem:[#allocation7 + $0x1b8] sm:$0xff]
    %v1590 = vld [vmem:[#allocation7 + $0x1c0] sm:$0xff]
    %v1591 = vld [vmem:[#allocation7 + $0x1c8] sm:$0xff]
    %v1592 = vld [vmem:[#allocation7 + $0x1d0] sm:$0xff]
    %v1593 = vld [vmem:[#allocation7 + $0x1d8] sm:$0xff]
    %v1594 = vld [vmem:[#allocation7 + $0x1e0] sm:$0xff]
    %v1595 = vld [vmem:[#allocation7 + $0x1e8] sm:$0xff]
    %v1596 = vld [vmem:[#allocation7 + $0x1f0] sm:$0xff]
    %v1597 = vld [vmem:[#allocation7 + $0x1f8] sm:$0xff]
    %v1662 = vunpack.c.l.b16 %v1534
    %v1663 = vunpack.c.h.b16 %v1534
    %v1664 = vunpack.c.l.b16 %v1535
    %v1665 = vunpack.c.h.b16 %v1535
    %v1666 = vunpack.c.l.b16 %v1536
    %v1667 = vunpack.c.h.b16 %v1536
    %v1668 = vunpack.c.l.b16 %v1537
    %v1669 = vunpack.c.h.b16 %v1537
    %v1670 = vunpack.c.l.b16 %v1538
    %v1671 = vunpack.c.h.b16 %v1538
    %v1672 = vunpack.c.l.b16 %v1539
    %v1673 = vunpack.c.h.b16 %v1539
    %v1674 = vunpack.c.l.b16 %v1540
    %v1675 = vunpack.c.h.b16 %v1540
    %v1676 = vunpack.c.l.b16 %v1541
    %v1677 = vunpack.c.h.b16 %v1541
    %v1678 = vunpack.c.l.b16 %v1542
    %v1679 = vunpack.c.h.b16 %v1542
    %v1680 = vunpack.c.l.b16 %v1543
    %v1681 = vunpack.c.h.b16 %v1543
    %v1682 = vunpack.c.l.b16 %v1544
    %v1683 = vunpack.c.h.b16 %v1544
    %v1684 = vunpack.c.l.b16 %v1545
    %v1685 = vunpack.c.h.b16 %v1545
    %v1686 = vunpack.c.l.b16 %v1546
    %v1687 = vunpack.c.h.b16 %v1546
    %v1688 = vunpack.c.l.b16 %v1547
    %v1689 = vunpack.c.h.b16 %v1547
    %v1690 = vunpack.c.l.b16 %v1548
    %v1691 = vunpack.c.h.b16 %v1548
    %v1692 = vunpack.c.l.b16 %v1549
    %v1693 = vunpack.c.h.b16 %v1549
    %v1694 = vunpack.c.l.b16 %v1550
    %v1695 = vunpack.c.h.b16 %v1550
    %v1696 = vunpack.c.l.b16 %v1551
    %v1697 = vunpack.c.h.b16 %v1551
    %v1698 = vunpack.c.l.b16 %v1552
    %v1699 = vunpack.c.h.b16 %v1552
    %v1700 = vunpack.c.l.b16 %v1553
    %v1701 = vunpack.c.h.b16 %v1553
    %v1702 = vunpack.c.l.b16 %v1554
    %v1703 = vunpack.c.h.b16 %v1554
    %v1704 = vunpack.c.l.b16 %v1555
    %v1705 = vunpack.c.h.b16 %v1555
    %v1706 = vunpack.c.l.b16 %v1556
    %v1707 = vunpack.c.h.b16 %v1556
    %v1708 = vunpack.c.l.b16 %v1557
    %v1709 = vunpack.c.h.b16 %v1557
    %v1710 = vunpack.c.l.b16 %v1558
    %v1711 = vunpack.c.h.b16 %v1558
    %v1712 = vunpack.c.l.b16 %v1559
    %v1713 = vunpack.c.h.b16 %v1559
    %v1714 = vunpack.c.l.b16 %v1560
    %v1715 = vunpack.c.h.b16 %v1560
    %v1716 = vunpack.c.l.b16 %v1561
    %v1717 = vunpack.c.h.b16 %v1561
    %v1718 = vunpack.c.l.b16 %v1562
    %v1719 = vunpack.c.h.b16 %v1562
    %v1720 = vunpack.c.l.b16 %v1563
    %v1721 = vunpack.c.h.b16 %v1563
    %v1722 = vunpack.c.l.b16 %v1564
    %v1723 = vunpack.c.h.b16 %v1564
    %v1724 = vunpack.c.l.b16 %v1565
    %v1725 = vunpack.c.h.b16 %v1565
    %v1726 = vunpack.c.l.b16 %v1566
    %v1727 = vunpack.c.h.b16 %v1566
    %v1728 = vunpack.c.l.b16 %v1567
    %v1729 = vunpack.c.h.b16 %v1567
    %v1730 = vunpack.c.l.b16 %v1568
    %v1731 = vunpack.c.h.b16 %v1568
    %v1732 = vunpack.c.l.b16 %v1569
    %v1733 = vunpack.c.h.b16 %v1569
    %v1734 = vunpack.c.l.b16 %v1570
    %v1735 = vunpack.c.h.b16 %v1570
    %v1736 = vunpack.c.l.b16 %v1571
    %v1737 = vunpack.c.h.b16 %v1571
    %v1738 = vunpack.c.l.b16 %v1572
    %v1739 = vunpack.c.h.b16 %v1572
    %v1740 = vunpack.c.l.b16 %v1573
    %v1741 = vunpack.c.h.b16 %v1573
    %v1742 = vunpack.c.l.b16 %v1574
    %v1743 = vunpack.c.h.b16 %v1574
    %v1744 = vunpack.c.l.b16 %v1575
    %v1745 = vunpack.c.h.b16 %v1575
    %v1746 = vunpack.c.l.b16 %v1576
    %v1747 = vunpack.c.h.b16 %v1576
    %v1748 = vunpack.c.l.b16 %v1577
    %v1749 = vunpack.c.h.b16 %v1577
    %v1750 = vunpack.c.l.b16 %v1578
    %v1751 = vunpack.c.h.b16 %v1578
    %v1752 = vunpack.c.l.b16 %v1579
    %v1753 = vunpack.c.h.b16 %v1579
    %v1754 = vunpack.c.l.b16 %v1580
    %v1755 = vunpack.c.h.b16 %v1580
    %v1756 = vunpack.c.l.b16 %v1581
    %v1757 = vunpack.c.h.b16 %v1581
    %v1758 = vunpack.c.l.b16 %v1582
    %v1759 = vunpack.c.h.b16 %v1582
    %v1760 = vunpack.c.l.b16 %v1583
    %v1761 = vunpack.c.h.b16 %v1583
    %v1762 = vunpack.c.l.b16 %v1584
    %v1763 = vunpack.c.h.b16 %v1584
    %v1764 = vunpack.c.l.b16 %v1585
    %v1765 = vunpack.c.h.b16 %v1585
    %v1766 = vunpack.c.l.b16 %v1586
    %v1767 = vunpack.c.h.b16 %v1586
    %v1768 = vunpack.c.l.b16 %v1587
    %v1769 = vunpack.c.h.b16 %v1587
    %v1770 = vunpack.c.l.b16 %v1588
    %v1771 = vunpack.c.h.b16 %v1588
    %v1772 = vunpack.c.l.b16 %v1589
    %v1773 = vunpack.c.h.b16 %v1589
    %v1774 = vunpack.c.l.b16 %v1590
    %v1775 = vunpack.c.h.b16 %v1590
    %v1776 = vunpack.c.l.b16 %v1591
    %v1777 = vunpack.c.h.b16 %v1591
    %v1778 = vunpack.c.l.b16 %v1592
    %v1779 = vunpack.c.h.b16 %v1592
    %v1780 = vunpack.c.l.b16 %v1593
    %v1781 = vunpack.c.h.b16 %v1593
    %v1782 = vunpack.c.l.b16 %v1594
    %v1783 = vunpack.c.h.b16 %v1594
    %v1784 = vunpack.c.l.b16 %v1595
    %v1785 = vunpack.c.h.b16 %v1595
    %v1786 = vunpack.c.l.b16 %v1596
    %v1787 = vunpack.c.h.b16 %v1596
    %v1788 = vunpack.c.l.b16 %v1597
    %v1789 = vunpack.c.h.b16 %v1597
    %v1790 = vpack.c.b16 %v1664, %v1662
    %v1791 = vpack.c.b16 %v1665, %v1663
    %v1792 = vpack.c.b16 %v1668, %v1666
    %v1793 = vpack.c.b16 %v1669, %v1667
    %v1794 = vpack.c.b16 %v1672, %v1670
    %v1795 = vpack.c.b16 %v1673, %v1671
    %v1796 = vpack.c.b16 %v1676, %v1674
    %v1797 = vpack.c.b16 %v1677, %v1675
    %v1798 = vpack.c.b16 %v1680, %v1678
    %v1799 = vpack.c.b16 %v1681, %v1679
    %v1800 = vpack.c.b16 %v1684, %v1682
    %v1801 = vpack.c.b16 %v1685, %v1683
    %v1802 = vpack.c.b16 %v1688, %v1686
    %v1803 = vpack.c.b16 %v1689, %v1687
    %v1804 = vpack.c.b16 %v1692, %v1690
    %v1805 = vpack.c.b16 %v1693, %v1691
    %v1806 = vpack.c.b16 %v1696, %v1694
    %v1807 = vpack.c.b16 %v1697, %v1695
    %v1808 = vpack.c.b16 %v1700, %v1698
    %v1809 = vpack.c.b16 %v1701, %v1699
    %v1810 = vpack.c.b16 %v1704, %v1702
    %v1811 = vpack.c.b16 %v1705, %v1703
    %v1812 = vpack.c.b16 %v1708, %v1706
    %v1813 = vpack.c.b16 %v1709, %v1707
    %v1814 = vpack.c.b16 %v1712, %v1710
    %v1815 = vpack.c.b16 %v1713, %v1711
    %v1816 = vpack.c.b16 %v1716, %v1714
    %v1817 = vpack.c.b16 %v1717, %v1715
    %v1818 = vpack.c.b16 %v1720, %v1718
    %v1819 = vpack.c.b16 %v1721, %v1719
    %v1820 = vpack.c.b16 %v1724, %v1722
    %v1821 = vpack.c.b16 %v1725, %v1723
    %v1822 = vpack.c.b16 %v1728, %v1726
    %v1823 = vpack.c.b16 %v1729, %v1727
    %v1824 = vpack.c.b16 %v1732, %v1730
    %v1825 = vpack.c.b16 %v1733, %v1731
    %v1826 = vpack.c.b16 %v1736, %v1734
    %v1827 = vpack.c.b16 %v1737, %v1735
    %v1828 = vpack.c.b16 %v1740, %v1738
    %v1829 = vpack.c.b16 %v1741, %v1739
    %v1830 = vpack.c.b16 %v1744, %v1742
    %v1831 = vpack.c.b16 %v1745, %v1743
    %v1832 = vpack.c.b16 %v1748, %v1746
    %v1833 = vpack.c.b16 %v1749, %v1747
    %v1834 = vpack.c.b16 %v1752, %v1750
    %v1835 = vpack.c.b16 %v1753, %v1751
    %v1836 = vpack.c.b16 %v1756, %v1754
    %v1837 = vpack.c.b16 %v1757, %v1755
    %v1838 = vpack.c.b16 %v1760, %v1758
    %v1839 = vpack.c.b16 %v1761, %v1759
    %v1840 = vpack.c.b16 %v1764, %v1762
    %v1841 = vpack.c.b16 %v1765, %v1763
    %v1842 = vpack.c.b16 %v1768, %v1766
    %v1843 = vpack.c.b16 %v1769, %v1767
    %v1844 = vpack.c.b16 %v1772, %v1770
    %v1845 = vpack.c.b16 %v1773, %v1771
    %v1846 = vpack.c.b16 %v1776, %v1774
    %v1847 = vpack.c.b16 %v1777, %v1775
    %v1848 = vpack.c.b16 %v1780, %v1778
    %v1849 = vpack.c.b16 %v1781, %v1779
    %v1850 = vpack.c.b16 %v1784, %v1782
    %v1851 = vpack.c.b16 %v1785, %v1783
    %v1852 = vpack.c.b16 %v1788, %v1786
    %v1853 = vpack.c.b16 %v1789, %v1787
    %1918 = vmatprep.subr.bf16.mxu0 %v1791
    %1919 = vmatpush1.bf16.msra.mxu0 %v1790
    %1920 = vmatprep.subr.bf16.mxu0 %v1793
    %1921 = vmatpush1.bf16.msra.mxu0 %v1792
    %1922 = vmatprep.subr.bf16.mxu0 %v1795
    %1923 = vmatpush1.bf16.msra.mxu0 %v1794
    %1924 = vmatprep.subr.bf16.mxu0 %v1797
    %1925 = vmatpush1.bf16.msra.mxu0 %v1796
    %1926 = vmatprep.subr.bf16.mxu0 %v1799
    %1927 = vmatpush1.bf16.msra.mxu0 %v1798
    %1928 = vmatprep.subr.bf16.mxu0 %v1801
    %1929 = vmatpush1.bf16.msra.mxu0 %v1800
    %1930 = vmatprep.subr.bf16.mxu0 %v1803
    %1931 = vmatpush1.bf16.msra.mxu0 %v1802
    %1932 = vmatprep.subr.bf16.mxu0 %v1805
    %1933 = vmatpush1.bf16.msra.mxu0 %v1804
    %1934 = vmatprep.subr.bf16.mxu0 %v1807
    %1935 = vmatpush1.bf16.msra.mxu0 %v1806
    %1936 = vmatprep.subr.bf16.mxu0 %v1809
    %1937 = vmatpush1.bf16.msra.mxu0 %v1808
    %1938 = vmatprep.subr.bf16.mxu0 %v1811
    %1939 = vmatpush1.bf16.msra.mxu0 %v1810
    %1940 = vmatprep.subr.bf16.mxu0 %v1813
    %1941 = vmatpush1.bf16.msra.mxu0 %v1812
    %1942 = vmatprep.subr.bf16.mxu0 %v1815
    %1943 = vmatpush1.bf16.msra.mxu0 %v1814
    %1944 = vmatprep.subr.bf16.mxu0 %v1817
    %1945 = vmatpush1.bf16.msra.mxu0 %v1816
    %1946 = vmatprep.subr.bf16.mxu0 %v1819
    %1947 = vmatpush1.bf16.msra.mxu0 %v1818
    %1948 = vmatprep.subr.bf16.mxu0 %v1821
    %1949 = vmatpush1.bf16.msra.mxu0 %v1820
    %1950 = vmatprep.mubr.bf16.mxu0 %v1531
    %1951 = vmatmul.mubr.bf16.gmra.mrb[0].mxu0 %v1530
    %v1952 = vpop.f32.mrb[0].mxu0
    %v1953 = vadd.f32 0.0, %v1952
    %v1954 = vpop.f32.mrb[0].mxu0
    %v1955 = vadd.f32 0.0, %v1954
    %v1956 = vpop.f32.mrb[0].mxu0
    %v1957 = vadd.f32 0.0, %v1956
    %v1958 = vpop.f32.mrb[0].mxu0
    %v1959 = vadd.f32 0.0, %v1958
    %1960 = vdwg.mxu0
    %1961 = vmatprep.subr.bf16.mxu0 %v1823
    %1962 = vmatpush1.bf16.msra.mxu0 %v1822
    %1963 = vmatprep.subr.bf16.mxu0 %v1825
    %1964 = vmatpush1.bf16.msra.mxu0 %v1824
    %1965 = vmatprep.subr.bf16.mxu0 %v1827
    %1966 = vmatpush1.bf16.msra.mxu0 %v1826
    %1967 = vmatprep.subr.bf16.mxu0 %v1829
    %1968 = vmatpush1.bf16.msra.mxu0 %v1828
    %1969 = vmatprep.subr.bf16.mxu0 %v1831
    %1970 = vmatpush1.bf16.msra.mxu0 %v1830
    %1971 = vmatprep.subr.bf16.mxu0 %v1833
    %1972 = vmatpush1.bf16.msra.mxu0 %v1832
    %1973 = vmatprep.subr.bf16.mxu0 %v1835
    %1974 = vmatpush1.bf16.msra.mxu0 %v1834
    %1975 = vmatprep.subr.bf16.mxu0 %v1837
    %1976 = vmatpush1.bf16.msra.mxu0 %v1836
    %1977 = vmatprep.subr.bf16.mxu0 %v1839
    %1978 = vmatpush1.bf16.msra.mxu0 %v1838
    %1979 = vmatprep.subr.bf16.mxu0 %v1841
    %1980 = vmatpush1.bf16.msra.mxu0 %v1840
    %1981 = vmatprep.subr.bf16.mxu0 %v1843
    %1982 = vmatpush1.bf16.msra.mxu0 %v1842
    %1983 = vmatprep.subr.bf16.mxu0 %v1845
    %1984 = vmatpush1.bf16.msra.mxu0 %v1844
    %1985 = vmatprep.subr.bf16.mxu0 %v1847
    %1986 = vmatpush1.bf16.msra.mxu0 %v1846
    %1987 = vmatprep.subr.bf16.mxu0 %v1849
    %1988 = vmatpush1.bf16.msra.mxu0 %v1848
    %1989 = vmatprep.subr.bf16.mxu0 %v1851
    %1990 = vmatpush1.bf16.msra.mxu0 %v1850
    %1991 = vmatprep.subr.bf16.mxu0 %v1853
    %1992 = vmatpush1.bf16.msra.mxu0 %v1852
    %1993 = vmatprep.mubr.bf16.mxu0 %v1533
    %1994 = vmatmul.mubr.bf16.gmra.mrb[0].mxu0 %v1532
    %v1995 = vpop.f32.mrb[0].mxu0
    %v1996 = vadd.f32 %v1953, %v1995
    %v1997 = vpop.f32.mrb[0].mxu0
    %v1998 = vadd.f32 %v1955, %v1997
    %v1999 = vpop.f32.mrb[0].mxu0
    %v2000 = vadd.f32 %v1957, %v1999
    %v2001 = vpop.f32.mrb[0].mxu0
    %v2002 = vadd.f32 %v1959, %v2001
    %2003 = vdwg.mxu0
    %v2004 = vmul.f32 %v1996, %v1528
    %v2005 = vmul.f32 %v1998, %v1528
    %v2006 = vmul.f32 %v2000, %v1529
    %v2007 = vmul.f32 %v2002, %v1529
    %v2008 = vld [vmem:[%s3] sm:$0x3]
    %v2010 = vlaneseq
    %v2011 = vshrl.u32 %v2010, 7
    %v2012 = vsub.s32 0, %v2011
    %v2013 = vrot.slane %v2008, %v2012
    %v2014 = vlaneseq
    %v2015 = vshrl.u32 %v2014, 7
    %v2016 = vsub.s32 1, %v2015
    %v2017 = vrot.slane %v2008, %v2016
    %v2020 = vadd.f32 %v2004, %v2013
    %v2021 = vadd.f32 %v2005, %v2017
    %v2022 = vadd.f32 %v2006, %v2013
    %v2023 = vadd.f32 %v2007, %v2017
    %v2024 = vmax.f32 %v2020, 0.0
    %v2025 = vmax.f32 %v2021, 0.0
    %v2026 = vmax.f32 %v2022, 0.0
    %v2027 = vmax.f32 %v2023, 0.0
    %v2028 = vpack.c.bf16 %v2026, %v2024
    %v2029 = vpack.c.bf16 %v2027, %v2025
    %v2030 = vld [vmem:[#allocation8] sm:$0xf]
    %v2031 = vld [vmem:[#allocation8 + $0x4] sm:$0xf]
    %v2032 = vld [vmem:[#allocation8 + $0x8] sm:$0xf]
    %v2033 = vld [vmem:[#allocation8 + $0xc] sm:$0xf]
    %v2034 = vld [vmem:[#allocation8 + $0x10] sm:$0xf]
    %v2035 = vld [vmem:[#allocation8 + $0x14] sm:$0xf]
    %v2036 = vld [vmem:[#allocation8 + $0x18] sm:$0xf]
    %v2037 = vld [vmem:[#allocation8 + $0x1c] sm:$0xf]
    %v2038 = vld [vmem:[#allocation8 + $0x20] sm:$0xf]
    %v2039 = vld [vmem:[#allocation8 + $0x24] sm:$0xf]
    %v2040 = vld [vmem:[#allocation8 + $0x28] sm:$0xf]
    %v2041 = vld [vmem:[#allocation8 + $0x2c] sm:$0xf]
    %v2042 = vld [vmem:[#allocation8 + $0x30] sm:$0xf]
    %v2043 = vld [vmem:[#allocation8 + $0x34] sm:$0xf]
    %v2044 = vld [vmem:[#allocation8 + $0x38] sm:$0xf]
    %v2045 = vld [vmem:[#allocation8 + $0x3c] sm:$0xf]
    %v2046 = vld [vmem:[#allocation8 + $0x40] sm:$0xf]
    %v2047 = vld [vmem:[#allocation8 + $0x44] sm:$0xf]
    %v2048 = vld [vmem:[#allocation8 + $0x48] sm:$0xf]
    %v2049 = vld [vmem:[#allocation8 + $0x4c] sm:$0xf]
    %v2050 = vld [vmem:[#allocation8 + $0x50] sm:$0xf]
    %v2051 = vld [vmem:[#allocation8 + $0x54] sm:$0xf]
    %v2052 = vld [vmem:[#allocation8 + $0x58] sm:$0xf]
    %v2053 = vld [vmem:[#allocation8 + $0x5c] sm:$0xf]
    %v2054 = vld [vmem:[#allocation8 + $0x60] sm:$0xf]
    %v2055 = vld [vmem:[#allocation8 + $0x64] sm:$0xf]
    %v2056 = vld [vmem:[#allocation8 + $0x68] sm:$0xf]
    %v2057 = vld [vmem:[#allocation8 + $0x6c] sm:$0xf]
    %v2058 = vld [vmem:[#allocation8 + $0x70] sm:$0xf]
    %v2059 = vld [vmem:[#allocation8 + $0x74] sm:$0xf]
    %v2060 = vld [vmem:[#allocation8 + $0x78] sm:$0xf]
    %v2061 = vld [vmem:[#allocation8 + $0x7c] sm:$0xf]
    %v2062 = vld [vmem:[%s5] sm:$0x1]
    %v2064 = vlaneseq
    %v2065 = vshrl.u32 %v2064, 7
    %v2066 = vsub.s32 0, %v2065
    %v2067 = vrot.slane %v2062, %v2066
    %v2101 = vunpack.c.l.b16 %v2030
    %v2102 = vunpack.c.l.b16 %v2031
    %v2103 = vunpack.c.l.b16 %v2032
    %v2104 = vunpack.c.l.b16 %v2033
    %v2105 = vunpack.c.l.b16 %v2034
    %v2106 = vunpack.c.l.b16 %v2035
    %v2107 = vunpack.c.l.b16 %v2036
    %v2108 = vunpack.c.l.b16 %v2037
    %v2109 = vunpack.c.l.b16 %v2038
    %v2110 = vunpack.c.l.b16 %v2039
    %v2111 = vunpack.c.l.b16 %v2040
    %v2112 = vunpack.c.l.b16 %v2041
    %v2113 = vunpack.c.l.b16 %v2042
    %v2114 = vunpack.c.l.b16 %v2043
    %v2115 = vunpack.c.l.b16 %v2044
    %v2116 = vunpack.c.l.b16 %v2045
    %v2117 = vunpack.c.l.b16 %v2046
    %v2118 = vunpack.c.l.b16 %v2047
    %v2119 = vunpack.c.l.b16 %v2048
    %v2120 = vunpack.c.l.b16 %v2049
    %v2121 = vunpack.c.l.b16 %v2050
    %v2122 = vunpack.c.l.b16 %v2051
    %v2123 = vunpack.c.l.b16 %v2052
    %v2124 = vunpack.c.l.b16 %v2053
    %v2125 = vunpack.c.l.b16 %v2054
    %v2126 = vunpack.c.l.b16 %v2055
    %v2127 = vunpack.c.l.b16 %v2056
    %v2128 = vunpack.c.l.b16 %v2057
    %v2129 = vunpack.c.l.b16 %v2058
    %v2130 = vunpack.c.l.b16 %v2059
    %v2131 = vunpack.c.l.b16 %v2060
    %v2132 = vunpack.c.l.b16 %v2061
    %v2133 = vpack.c.b16 %v2102, %v2101
    %v2134 = vpack.c.b16 %v2104, %v2103
    %v2135 = vpack.c.b16 %v2106, %v2105
    %v2136 = vpack.c.b16 %v2108, %v2107
    %v2137 = vpack.c.b16 %v2110, %v2109
    %v2138 = vpack.c.b16 %v2112, %v2111
    %v2139 = vpack.c.b16 %v2114, %v2113
    %v2140 = vpack.c.b16 %v2116, %v2115
    %v2141 = vpack.c.b16 %v2118, %v2117
    %v2142 = vpack.c.b16 %v2120, %v2119
    %v2143 = vpack.c.b16 %v2122, %v2121
    %v2144 = vpack.c.b16 %v2124, %v2123
    %v2145 = vpack.c.b16 %v2126, %v2125
    %v2146 = vpack.c.b16 %v2128, %v2127
    %v2147 = vpack.c.b16 %v2130, %v2129
    %v2148 = vpack.c.b16 %v2132, %v2131
    %2165 = vmatprep.subr.bf16.mxu0 0
    %2166 = vmatpush1.bf16.msra.mxu0 %v2133
    %2167 = vmatprep.subr.bf16.mxu0 0
    %2168 = vmatpush1.bf16.msra.mxu0 %v2134
    %2169 = vmatprep.subr.bf16.mxu0 0
    %2170 = vmatpush1.bf16.msra.mxu0 %v2135
    %2171 = vmatprep.subr.bf16.mxu0 0
    %2172 = vmatpush1.bf16.msra.mxu0 %v2136
    %2173 = vmatprep.subr.bf16.mxu0 0
    %2174 = vmatpush1.bf16.msra.mxu0 %v2137
    %2175 = vmatprep.subr.bf16.mxu0 0
    %2176 = vmatpush1.bf16.msra.mxu0 %v2138
    %2177 = vmatprep.subr.bf16.mxu0 0
    %2178 = vmatpush1.bf16.msra.mxu0 %v2139
    %2179 = vmatprep.subr.bf16.mxu0 0
    %2180 = vmatpush1.bf16.msra.mxu0 %v2140
    %2181 = vmatprep.subr.bf16.mxu0 0
    %2182 = vmatpush1.bf16.msra.mxu0 %v2141
    %2183 = vmatprep.subr.bf16.mxu0 0
    %2184 = vmatpush1.bf16.msra.mxu0 %v2142
    %2185 = vmatprep.subr.bf16.mxu0 0
    %2186 = vmatpush1.bf16.msra.mxu0 %v2143
    %2187 = vmatprep.subr.bf16.mxu0 0
    %2188 = vmatpush1.bf16.msra.mxu0 %v2144
    %2189 = vmatprep.subr.bf16.mxu0 0
    %2190 = vmatpush1.bf16.msra.mxu0 %v2145
    %2191 = vmatprep.subr.bf16.mxu0 0
    %2192 = vmatpush1.bf16.msra.mxu0 %v2146
    %2193 = vmatprep.subr.bf16.mxu0 0
    %2194 = vmatpush1.bf16.msra.mxu0 %v2147
    %2195 = vmatprep.subr.bf16.mxu0 0
    %2196 = vmatpush1.bf16.msra.mxu0 %v2148
    %2197 = vmatprep.mubr.bf16.mxu0 %v2029
    %2198 = vmatmul.mubr.bf16.gmra.mrb[0].mxu0 %v2028
    %v2199 = vpop.f32.mrb[0].mxu0
    %v2200 = vadd.f32 %v2067, %v2199
    %v2201 = vpop.f32.mrb[0].mxu0
    %v2202 = vpop.f32.mrb[0].mxu0
    %v2203 = vadd.f32 %v2067, %v2202
    %v2204 = vpop.f32.mrb[0].mxu0
    %2205 = vdwg.mxu0
    %2206 = vst [vmem:[#allocation10] sm:$0xff] %v2200
    %2207 = vst [vmem:[#allocation10 + $0x8] sm:$0xff] %v2203
    // Predicated region
    $region42: #{tpu_custom_call.1} parent=1 // pred_check
      _
    $region43: #{tpu_custom_call.1} parent=1 // pred_check_branch
      %2209 = sbr.rel (0) target = $region45
    $region44: #{tpu_custom_call.1} parent=1 // pred_region
      %s2211 = ssub.s32 256, 256
      %2212 = vsyncadd [#allocation4], %s2211
      %s2213 = sshll.u32 [#allocation10], 4
      %s2214 = int_to_ptr.vmem [resolvable:$true] %s2213
      %2219 = dma.vmem_to_hbm [thread:$0]  %s2214, 256, %s6, [#allocation4], 128, 128, 8
    $region45: #{tpu_custom_call.1} parent=1 // pred_fallthru
      _
    // Predicated region
    $region46: #{tpu_custom_call.1} parent=1 // pred_check
      _
    $region47: #{tpu_custom_call.1} parent=1 // pred_check_branch
      %2221 = sbr.rel (0) target = $region49
    $region48: #{tpu_custom_call.1} parent=1 // pred_region
      %2222 = dma.done [#allocation4], 256
    $region49: #{tpu_custom_call.1} parent=1 // pred_fallthru
      _
    %2223 = vsyncpa [#allocation3], 1
    %2224 = vsyncpa [#allocation6], 1
    %2225 = vsyncpa [#allocation9], 1
    %2226 = vsyncpa [#allocation4], 1

</llo_original>
